<compile_context>
chip_gen: v7x
topology: tpu7x:2x2x1
jax: 0.10.0
libtpu: 0.0.40
codegen_flags: <defaults>
</compile_context>

<pallas_src>
import functools

import jax
import jax.numpy as jnp
from jax.experimental import pallas as pl
from jax.experimental.pallas import tpu as pltpu

HIDDEN = 120
NEG_SLOPE = 0.01  # nn.LeakyReLU default negative_slope


def _round_up(x, m):
    return (x + m - 1) // m * m


def _leaky_relu(h):
    return jnp.where(h > 0, h, NEG_SLOPE * h)


def force_network_kernel(
    x_ref,
    w1_ref, b1_ref,
    w2_ref, b2_ref,
    w3_ref, b3_ref,
    w4_ref, b4_ref,
    w5_ref, b5_ref,
    o_ref,
    *, matmul_dtype,
):
    def linear(h, w_ref, b_ref):
        # MXU matmul (operands in matmul_dtype, f32 accumulate) + f32 bias add.
        return (
            jnp.dot(h.astype(matmul_dtype), w_ref[...],
                    preferred_element_type=jnp.float32)
            + b_ref[...]
        )

    h = x_ref[...]
    h = _leaky_relu(linear(h, w1_ref, b1_ref))
    h = _leaky_relu(linear(h, w2_ref, b2_ref))
    h = _leaky_relu(linear(h, w3_ref, b3_ref))
    h = _leaky_relu(linear(h, w4_ref, b4_ref))
    out = linear(h, w5_ref, b5_ref)   # no activation on the last layer
    o_ref[...] = out.astype(o_ref.dtype)


def force_network_forward(x, params, *, tile_m=256, matmul_dtype=jnp.float32,
                          interpret=False):
    """x: (N, in_channels) float32.  Returns (N, out_channels) float32."""
    n, in_dim = x.shape
    out_dim = params["b5"].shape[-1]

    # Lane-aligned (128) padded feature sizes; zero padding is numerically exact.
    kp = _round_up(max(in_dim, 1), 128)
    hp = _round_up(HIDDEN, 128)          # 120 -> 128
    op = _round_up(max(out_dim, 1), 128)  # lane-dense output store

    # Batch tiling: shrink the tile for tiny batches, pad N up to a tile multiple.
    tile_m = min(tile_m, _round_up(n, 8))
    m_pad = _round_up(n, tile_m)
    grid = (m_pad // tile_m,)

    # --- pad inputs / parameters (zeros in all padded rows/cols/lanes) --------
    x_p = jnp.zeros((m_pad, kp), matmul_dtype).at[:n, :in_dim].set(
        x.astype(matmul_dtype))

    def pad_w(w, rows, cols):
        return jnp.zeros((rows, cols), matmul_dtype).at[
            : w.shape[0], : w.shape[1]
        ].set(w.astype(matmul_dtype))

    def pad_b(b, cols):
        return jnp.zeros((1, cols), jnp.float32).at[:, : b.shape[-1]].set(
            b.astype(jnp.float32))

    w1 = pad_w(params["w1"], kp, hp); b1 = pad_b(params["b1"], hp)
    w2 = pad_w(params["w2"], hp, hp); b2 = pad_b(params["b2"], hp)
    w3 = pad_w(params["w3"], hp, hp); b3 = pad_b(params["b3"], hp)
    w4 = pad_w(params["w4"], hp, hp); b4 = pad_b(params["b4"], hp)
    w5 = pad_w(params["w5"], hp, op); b5 = pad_b(params["b5"], op)

    args = (x_p, w1, b1, w2, b2, w3, b3, w4, b4, w5, b5)

    # --- BlockSpecs -----------------------------------------------------------
    # x / out: tiled along the batch (grid) axis.
    x_spec = pl.BlockSpec((tile_m, kp), lambda i: (i, 0))
    out_spec = pl.BlockSpec((tile_m, op), lambda i: (i, 0))

    # Weights / biases: full-array blocks with a CONSTANT block index, so the
    # pipeline keeps them resident instead of re-fetching every grid step.
    # (default-arg capture avoids the late-binding-lambda bug)
    def resident_spec(a):
        nd = a.ndim
        return pl.BlockSpec(a.shape, lambda i, _nd=nd: (0,) * _nd)

    in_specs = [x_spec] + [resident_spec(a) for a in args[1:]]

    # --- advisory cost estimate ----------------------------------------------
    flops = 2 * m_pad * (kp * hp + 3 * hp * hp + hp * op)
    bytes_accessed = (
        x_p.size * x_p.dtype.itemsize
        + m_pad * op * 4
        + sum(int(a.size) * a.dtype.itemsize for a in args[1:])
    )
    cost = pl.CostEstimate(flops=flops, transcendentals=0,
                           bytes_accessed=bytes_accessed)

    out_pad = pl.pallas_call(
        functools.partial(force_network_kernel, matmul_dtype=matmul_dtype),
        out_shape=jax.ShapeDtypeStruct((m_pad, op), jnp.float32),
        grid=grid,
        in_specs=in_specs,
        out_specs=out_spec,
        compiler_params=pltpu.CompilerParams(
            # batch axis is fully independent -> megacore-shardable on v7x
            dimension_semantics=("parallel",),
        ),
        cost_estimate=cost,
        interpret=interpret,
    )(*args)

    # slice padded batch rows and padded output lanes back off
    return out_pad[:n, :out_dim]


# ------------------------- test scaffolding ----------------------------------
def init_params(key, in_channels, out_channels, hidden=HIDDEN):
    """Mirror nn.Linear init: U(-1/sqrt(fan_in), 1/sqrt(fan_in)) for W and b.
    Weights stored as (in_features, out_features) so y = x @ W + b."""
    dims = [(in_channels, hidden), (hidden, hidden), (hidden, hidden),
            (hidden, hidden), (hidden, out_channels)]
    params = {}
    keys = jax.random.split(key, 2 * len(dims))
    for i, (fan_in, fan_out) in enumerate(dims, start=1):
        bound = 1.0 / float(fan_in) ** 0.5
        params[f"w{i}"] = jax.random.uniform(
            keys[2 * (i - 1)], (fan_in, fan_out), jnp.float32, -bound, bound)
        params[f"b{i}"] = jax.random.uniform(
            keys[2 * (i - 1) + 1], (1, fan_out), jnp.float32, -bound, bound)
    return params


def reference_forward(x, params):
    """Pure-JAX reference (same math, no Pallas)."""
    h = x
    for i in range(1, 5):
        h = h @ params[f"w{i}"] + params[f"b{i}"]
        h = jnp.where(h > 0, h, NEG_SLOPE * h)
    return h @ params["w5"] + params["b5"]


if __name__ == "__main__":
    in_channels = 54
    out_channels = 3
    batch = 500          # non-multiple of the tile -> exercises batch padding
    tile_m = 256         # -> grid=(2,), two pipelined / parallel batch tiles

    key = jax.random.PRNGKey(0)
    k_x, k_p = jax.random.split(key)
    x = jax.random.normal(k_x, (batch, in_channels), jnp.float32)
    params = init_params(k_p, in_channels, out_channels)

    out = force_network_forward(x, params, tile_m=tile_m)
    out = jax.block_until_ready(out)

    ref = reference_forward(x, params)
    assert out.shape == (batch, out_channels)
    assert jnp.allclose(out, ref, atol=1e-3, rtol=1e-3), \
        "mismatch vs pure-JAX reference"

    print("KERNEL_OK")
</pallas_src>

<mosaic_0001>
module attributes {stable_mosaic.version = 11 : i64} {
  func.func @force_network_kernel(%arg0: i32, %arg1: memref<256x128xf32, #tpu.memory_space<vmem>>, %arg2: memref<128x128xf32, #tpu.memory_space<vmem>>, %arg3: memref<1x128xf32, #tpu.memory_space<vmem>>, %arg4: memref<128x128xf32, #tpu.memory_space<vmem>>, %arg5: memref<1x128xf32, #tpu.memory_space<vmem>>, %arg6: memref<128x128xf32, #tpu.memory_space<vmem>>, %arg7: memref<1x128xf32, #tpu.memory_space<vmem>>, %arg8: memref<128x128xf32, #tpu.memory_space<vmem>>, %arg9: memref<1x128xf32, #tpu.memory_space<vmem>>, %arg10: memref<128x128xf32, #tpu.memory_space<vmem>>, %arg11: memref<1x128xf32, #tpu.memory_space<vmem>>, %arg12: memref<256x128xf32, #tpu.memory_space<vmem>>) attributes {dimension_semantics = [#tpu.dimension_semantics<parallel>], iteration_bounds = array<i64: 2>, scalar_prefetch = 0 : i64, scratch_operands = 0 : i64, tpu.core_type = #tpu.core_type<tc>, window_params = [{transform_indices = @transform_0, window_bounds = array<i64: 256, 128>}, {pipeline_mode = #tpu.pipeline_mode<synchronous>, transform_indices = @transform_1, window_bounds = array<i64: 128, 128>}, {pipeline_mode = #tpu.pipeline_mode<synchronous>, transform_indices = @transform_2, window_bounds = array<i64: 1, 128>}, {pipeline_mode = #tpu.pipeline_mode<synchronous>, transform_indices = @transform_3, window_bounds = array<i64: 128, 128>}, {pipeline_mode = #tpu.pipeline_mode<synchronous>, transform_indices = @transform_4, window_bounds = array<i64: 1, 128>}, {pipeline_mode = #tpu.pipeline_mode<synchronous>, transform_indices = @transform_5, window_bounds = array<i64: 128, 128>}, {pipeline_mode = #tpu.pipeline_mode<synchronous>, transform_indices = @transform_6, window_bounds = array<i64: 1, 128>}, {pipeline_mode = #tpu.pipeline_mode<synchronous>, transform_indices = @transform_7, window_bounds = array<i64: 128, 128>}, {pipeline_mode = #tpu.pipeline_mode<synchronous>, transform_indices = @transform_8, window_bounds = array<i64: 1, 128>}, {pipeline_mode = #tpu.pipeline_mode<synchronous>, transform_indices = @transform_9, window_bounds = array<i64: 128, 128>}, {pipeline_mode = #tpu.pipeline_mode<synchronous>, transform_indices = @transform_10, window_bounds = array<i64: 1, 128>}, {transform_indices = @transform_11, window_bounds = array<i64: 256, 128>}]} {
    %c0 = arith.constant 0 : index
    %c0_0 = arith.constant 0 : index
    %0 = vector.load %arg1[%c0, %c0_0] : memref<256x128xf32, #tpu.memory_space<vmem>>, vector<256x128xf32>
    %c0_1 = arith.constant 0 : index
    %c0_2 = arith.constant 0 : index
    %1 = vector.load %arg2[%c0_1, %c0_2] : memref<128x128xf32, #tpu.memory_space<vmem>>, vector<128x128xf32>
    %cst = arith.constant dense<0.000000e+00> : vector<256x128xf32>
    %2 = tpu.matmul %0, %1, %cst {dimension_numbers = #tpu.dot_dimension_numbers<[1], [0], [0], [1], [0, 0, 1, 1], [], []>} : vector<256x128xf32>, vector<128x128xf32>, vector<256x128xf32> -> vector<256x128xf32>
    %c0_3 = arith.constant 0 : index
    %c0_4 = arith.constant 0 : index
    %3 = vector.load %arg3[%c0_3, %c0_4] : memref<1x128xf32, #tpu.memory_space<vmem>>, vector<1x128xf32>
    %4 = vector.broadcast %3 : vector<1x128xf32> to vector<256x128xf32>
    %5 = arith.addf %2, %4 : vector<256x128xf32>
    %cst_5 = arith.constant 0.000000e+00 : f32
    %6 = vector.broadcast %cst_5 : f32 to vector<256x128xf32>
    %7 = arith.cmpf ogt, %5, %6 : vector<256x128xf32>
    %cst_6 = arith.constant 0.00999999977 : f32
    %8 = vector.broadcast %cst_6 : f32 to vector<256x128xf32>
    %9 = arith.mulf %8, %5 : vector<256x128xf32>
    %10 = arith.select %7, %5, %9 : vector<256x128xi1>, vector<256x128xf32>
    %c0_7 = arith.constant 0 : index
    %c0_8 = arith.constant 0 : index
    %11 = vector.load %arg4[%c0_7, %c0_8] : memref<128x128xf32, #tpu.memory_space<vmem>>, vector<128x128xf32>
    %cst_9 = arith.constant dense<0.000000e+00> : vector<256x128xf32>
    %12 = tpu.matmul %10, %11, %cst_9 {dimension_numbers = #tpu.dot_dimension_numbers<[1], [0], [0], [1], [0, 0, 1, 1], [], []>} : vector<256x128xf32>, vector<128x128xf32>, vector<256x128xf32> -> vector<256x128xf32>
    %c0_10 = arith.constant 0 : index
    %c0_11 = arith.constant 0 : index
    %13 = vector.load %arg5[%c0_10, %c0_11] : memref<1x128xf32, #tpu.memory_space<vmem>>, vector<1x128xf32>
    %14 = vector.broadcast %13 : vector<1x128xf32> to vector<256x128xf32>
    %15 = arith.addf %12, %14 : vector<256x128xf32>
    %cst_12 = arith.constant 0.000000e+00 : f32
    %16 = vector.broadcast %cst_12 : f32 to vector<256x128xf32>
    %17 = arith.cmpf ogt, %15, %16 : vector<256x128xf32>
    %cst_13 = arith.constant 0.00999999977 : f32
    %18 = vector.broadcast %cst_13 : f32 to vector<256x128xf32>
    %19 = arith.mulf %18, %15 : vector<256x128xf32>
    %20 = arith.select %17, %15, %19 : vector<256x128xi1>, vector<256x128xf32>
    %c0_14 = arith.constant 0 : index
    %c0_15 = arith.constant 0 : index
    %21 = vector.load %arg6[%c0_14, %c0_15] : memref<128x128xf32, #tpu.memory_space<vmem>>, vector<128x128xf32>
    %cst_16 = arith.constant dense<0.000000e+00> : vector<256x128xf32>
    %22 = tpu.matmul %20, %21, %cst_16 {dimension_numbers = #tpu.dot_dimension_numbers<[1], [0], [0], [1], [0, 0, 1, 1], [], []>} : vector<256x128xf32>, vector<128x128xf32>, vector<256x128xf32> -> vector<256x128xf32>
    %c0_17 = arith.constant 0 : index
    %c0_18 = arith.constant 0 : index
    %23 = vector.load %arg7[%c0_17, %c0_18] : memref<1x128xf32, #tpu.memory_space<vmem>>, vector<1x128xf32>
    %24 = vector.broadcast %23 : vector<1x128xf32> to vector<256x128xf32>
    %25 = arith.addf %22, %24 : vector<256x128xf32>
    %cst_19 = arith.constant 0.000000e+00 : f32
    %26 = vector.broadcast %cst_19 : f32 to vector<256x128xf32>
    %27 = arith.cmpf ogt, %25, %26 : vector<256x128xf32>
    %cst_20 = arith.constant 0.00999999977 : f32
    %28 = vector.broadcast %cst_20 : f32 to vector<256x128xf32>
    %29 = arith.mulf %28, %25 : vector<256x128xf32>
    %30 = arith.select %27, %25, %29 : vector<256x128xi1>, vector<256x128xf32>
    %c0_21 = arith.constant 0 : index
    %c0_22 = arith.constant 0 : index
    %31 = vector.load %arg8[%c0_21, %c0_22] : memref<128x128xf32, #tpu.memory_space<vmem>>, vector<128x128xf32>
    %cst_23 = arith.constant dense<0.000000e+00> : vector<256x128xf32>
    %32 = tpu.matmul %30, %31, %cst_23 {dimension_numbers = #tpu.dot_dimension_numbers<[1], [0], [0], [1], [0, 0, 1, 1], [], []>} : vector<256x128xf32>, vector<128x128xf32>, vector<256x128xf32> -> vector<256x128xf32>
    %c0_24 = arith.constant 0 : index
    %c0_25 = arith.constant 0 : index
    %33 = vector.load %arg9[%c0_24, %c0_25] : memref<1x128xf32, #tpu.memory_space<vmem>>, vector<1x128xf32>
    %34 = vector.broadcast %33 : vector<1x128xf32> to vector<256x128xf32>
    %35 = arith.addf %32, %34 : vector<256x128xf32>
    %cst_26 = arith.constant 0.000000e+00 : f32
    %36 = vector.broadcast %cst_26 : f32 to vector<256x128xf32>
    %37 = arith.cmpf ogt, %35, %36 : vector<256x128xf32>
    %cst_27 = arith.constant 0.00999999977 : f32
    %38 = vector.broadcast %cst_27 : f32 to vector<256x128xf32>
    %39 = arith.mulf %38, %35 : vector<256x128xf32>
    %40 = arith.select %37, %35, %39 : vector<256x128xi1>, vector<256x128xf32>
    %c0_28 = arith.constant 0 : index
    %c0_29 = arith.constant 0 : index
    %41 = vector.load %arg10[%c0_28, %c0_29] : memref<128x128xf32, #tpu.memory_space<vmem>>, vector<128x128xf32>
    %cst_30 = arith.constant dense<0.000000e+00> : vector<256x128xf32>
    %42 = tpu.matmul %40, %41, %cst_30 {dimension_numbers = #tpu.dot_dimension_numbers<[1], [0], [0], [1], [0, 0, 1, 1], [], []>} : vector<256x128xf32>, vector<128x128xf32>, vector<256x128xf32> -> vector<256x128xf32>
    %c0_31 = arith.constant 0 : index
    %c0_32 = arith.constant 0 : index
    %43 = vector.load %arg11[%c0_31, %c0_32] : memref<1x128xf32, #tpu.memory_space<vmem>>, vector<1x128xf32>
    %44 = vector.broadcast %43 : vector<1x128xf32> to vector<256x128xf32>
    %45 = arith.addf %42, %44 : vector<256x128xf32>
    %c0_33 = arith.constant 0 : index
    %c0_34 = arith.constant 0 : index
    %46 = vector.load %arg12[%c0_33, %c0_34] : memref<256x128xf32, #tpu.memory_space<vmem>>, vector<256x128xf32>
    tpu.vector_store %arg12[%c0_33, %c0_34], %45 {strides = array<i32>} : memref<256x128xf32, #tpu.memory_space<vmem>>, vector<256x128xf32>,
    return
  }
  func.func @transform_0(%arg0: i32) -> (i32, i32) {
    %c0_i32 = arith.constant 0 : i32
    %c0_i32_0 = arith.constant 0 : i32
    return %arg0, %c0_i32 : i32, i32
  }
  func.func @transform_1(%arg0: i32) -> (i32, i32) {
    %c0_i32 = arith.constant 0 : i32
    %c0_i32_0 = arith.constant 0 : i32
    %c0_i32_1 = arith.constant 0 : i32
    return %c0_i32, %c0_i32_0 : i32, i32
  }
  func.func @transform_2(%arg0: i32) -> (i32, i32) {
    %c0_i32 = arith.constant 0 : i32
    %c0_i32_0 = arith.constant 0 : i32
    %c0_i32_1 = arith.constant 0 : i32
    return %c0_i32, %c0_i32_0 : i32, i32
  }
  func.func @transform_3(%arg0: i32) -> (i32, i32) {
    %c0_i32 = arith.constant 0 : i32
    %c0_i32_0 = arith.constant 0 : i32
    %c0_i32_1 = arith.constant 0 : i32
    return %c0_i32, %c0_i32_0 : i32, i32
  }
  func.func @transform_4(%arg0: i32) -> (i32, i32) {
    %c0_i32 = arith.constant 0 : i32
    %c0_i32_0 = arith.constant 0 : i32
    %c0_i32_1 = arith.constant 0 : i32
    return %c0_i32, %c0_i32_0 : i32, i32
  }
  func.func @transform_5(%arg0: i32) -> (i32, i32) {
    %c0_i32 = arith.constant 0 : i32
    %c0_i32_0 = arith.constant 0 : i32
    %c0_i32_1 = arith.constant 0 : i32
    return %c0_i32, %c0_i32_0 : i32, i32
  }
  func.func @transform_6(%arg0: i32) -> (i32, i32) {
    %c0_i32 = arith.constant 0 : i32
    %c0_i32_0 = arith.constant 0 : i32
    %c0_i32_1 = arith.constant 0 : i32
    return %c0_i32, %c0_i32_0 : i32, i32
  }
  func.func @transform_7(%arg0: i32) -> (i32, i32) {
    %c0_i32 = arith.constant 0 : i32
    %c0_i32_0 = arith.constant 0 : i32
    %c0_i32_1 = arith.constant 0 : i32
    return %c0_i32, %c0_i32_0 : i32, i32
  }
  func.func @transform_8(%arg0: i32) -> (i32, i32) {
    %c0_i32 = arith.constant 0 : i32
    %c0_i32_0 = arith.constant 0 : i32
    %c0_i32_1 = arith.constant 0 : i32
    return %c0_i32, %c0_i32_0 : i32, i32
  }
  func.func @transform_9(%arg0: i32) -> (i32, i32) {
    %c0_i32 = arith.constant 0 : i32
    %c0_i32_0 = arith.constant 0 : i32
    %c0_i32_1 = arith.constant 0 : i32
    return %c0_i32, %c0_i32_0 : i32, i32
  }
  func.func @transform_10(%arg0: i32) -> (i32, i32) {
    %c0_i32 = arith.constant 0 : i32
    %c0_i32_0 = arith.constant 0 : i32
    %c0_i32_1 = arith.constant 0 : i32
    return %c0_i32, %c0_i32_0 : i32, i32
  }
  func.func @transform_11(%arg0: i32) -> (i32, i32) {
    %c0_i32 = arith.constant 0 : i32
    %c0_i32_0 = arith.constant 0 : i32
    return %arg0, %c0_i32 : i32, i32
  }
}

</mosaic_0001>

<llo_original>
// kernel: tpu_custom_call.1
$region0: #{tpu_custom_call.1}
  #allocation0 [shape = 'u32[]', space=smem, size = 0x4, offset = 0x4, fixed_abs, tag = 'smem constant byte address 0x4 - core index']
  #allocation1 [shape = 'u32[144,128]{1,0:T(1,128)}', space=vmem, size = 0x12000, scoped, tag = 'internal scratch']
  %s0 = inlined_call_operand.hbm [shape: f32[512,128], index: 0, kind: input, shape index: {}]
  %s1 = inlined_call_operand.hbm [shape: f32[128,128], index: 1, kind: input, shape index: {}]
  %s2 = inlined_call_operand.vmem [shape: f32[1,128], index: 2, kind: input, shape index: {}]
  %s3 = inlined_call_operand.hbm [shape: f32[128,128], index: 3, kind: input, shape index: {}]
  %s4 = inlined_call_operand.vmem [shape: f32[1,128], index: 4, kind: input, shape index: {}]
  %s5 = inlined_call_operand.hbm [shape: f32[128,128], index: 5, kind: input, shape index: {}]
  %s6 = inlined_call_operand.vmem [shape: f32[1,128], index: 6, kind: input, shape index: {}]
  %s7 = inlined_call_operand.hbm [shape: f32[128,128], index: 7, kind: input, shape index: {}]
  %s8 = inlined_call_operand.vmem [shape: f32[1,128], index: 8, kind: input, shape index: {}]
  %s9 = inlined_call_operand.hbm [shape: f32[128,128], index: 9, kind: input, shape index: {}]
  %s10 = inlined_call_operand.vmem [shape: f32[1,128], index: 10, kind: input, shape index: {}]
  %s11 = inlined_call_operand.hbm [shape: f32[512,128], index: 11, kind: output, shape index: {}]
  %s12 = sld [smem:[#allocation0]]
  $region101: #{tpu_custom_call.1} parent=0
    _
  %s14 = ssub.s32 1, %s12
  %s15 = scalar_select 0, %s14, %s12
  $region1: #{tpu_custom_call.1} parent=0
    #allocation2 [shape = 'u8[262144]{0}', space=vmem, size = 0x40000, scoped, tag = 'input window, operand 0']
    #allocation3 [shape = 's32[2]{0}', space=sflag, size = 0x8, scoped, tag = 'scoped memory for tpu_custom_call.1']
    #allocation4 [shape = 's32[2]{0}', space=sflag, size = 0x8, scoped, tag = 'scoped memory for tpu_custom_call.1']
    #allocation5 [shape = 'u8[65536]{0}', space=vmem, size = 0x10000, scoped, tag = 'input window, operand 1, single buffered']
    #allocation6 [shape = 's32[1]{0}', space=sflag, size = 0x4, scoped, tag = 'scoped memory for tpu_custom_call.1']
    #allocation7 [shape = 'u8[65536]{0}', space=vmem, size = 0x10000, scoped, tag = 'input window, operand 3, single buffered']
    #allocation8 [shape = 'u8[65536]{0}', space=vmem, size = 0x10000, scoped, tag = 'input window, operand 5, single buffered']
    #allocation9 [shape = 's32[1]{0}', space=sflag, size = 0x4, scoped, tag = 'scoped memory for tpu_custom_call.1']
    #allocation10 [shape = 'u8[65536]{0}', space=vmem, size = 0x10000, scoped, tag = 'input window, operand 7, single buffered']
    #allocation11 [shape = 'u8[65536]{0}', space=vmem, size = 0x10000, scoped, tag = 'input window, operand 9, single buffered']
    #allocation12 [shape = 's32[1]{0}', space=sflag, size = 0x4, scoped, tag = 'scoped memory for tpu_custom_call.1']
    #allocation13 [shape = 'u8[262144]{0}', space=vmem, size = 0x40000, scoped, tag = 'output window, operand 0']
    %16 = vsyncpa [#allocation3], 0
    %s17 = scalar_lea.sflag [#allocation3], 1
    %18 = vsyncpa %s17, 0
    %19 = vsyncpa [#allocation6], 0
    %20 = vsyncpa [#allocation9], 0
    %21 = vsyncpa [#allocation12], 0
    %22 = vsyncpa [#allocation4], 0
    %s23 = scalar_lea.sflag [#allocation4], 1
    %24 = vsyncpa %s23, 0
    loop: start=0, step=1, limit=4
    $region2: #{tpu_custom_call.1} parent=1 // loop_pre_header
      _
    $region3: #{tpu_custom_call.1} parent=1 // loop_header
      %s26 = sphi 0, %s30
      %p27 = scmp.ge.s32.totalorder %s26, 4
      %s36 = sphi 0, %s38
      %s39 = sphi 0, %s36
      %s40 = sphi 0, %s39
      %s56 = sphi 0, %s40
      %s60 = sphi 0, %s60
      %s62 = sphi 0, %s60
      %s63 = sphi 0, %s62
      %s77 = sphi 0, %s63
      %s81 = sphi 0, %s81
      %s83 = sphi 0, %s81
      %s84 = sphi 0, %s83
      %s98 = sphi 0, %s84
      %s102 = sphi 0, %s102
      %s104 = sphi 0, %s102
      %s105 = sphi 0, %s104
      %s119 = sphi 0, %s105
      %s123 = sphi 0, %s123
      %s125 = sphi 0, %s123
      %s126 = sphi 0, %s125
      %s140 = sphi 0, %s126
      %s144 = sphi 0, %s144
      %s146 = sphi 0, %s144
      %s147 = sphi 0, %s146
      %s161 = sphi 0, %s147
      %s165 = sphi 0, %s165
      %s167 = sphi 0, %s165
      %s168 = sphi 0, %s167
      %s182 = sphi 0, %s168
      %s186 = sphi 0, %s186
      %s188 = sphi 0, %s186
      %s189 = sphi 0, %s188
      %s203 = sphi 0, %s189
      %s207 = sphi 0, %s207
      %s209 = sphi 0, %s207
      %s210 = sphi 0, %s209
      %s224 = sphi 0, %s210
      %s228 = sphi 0, %s228
      %s230 = sphi 0, %s228
      %s231 = sphi 0, %s230
      %s245 = sphi 0, %s231
      %s249 = sphi 0, %s249
      %s251 = sphi 0, %s249
      %s252 = sphi 0, %s251
      %s266 = sphi 0, %s252
      %s272 = sphi 0, %s274
      %s275 = sphi 0, %s272
      %s276 = sphi 0, %s275
      %s292 = sphi 0, %s276
    $region4: #{tpu_custom_call.1} parent=1 // loop_header_branch
      %29 = sbr.rel (%p27) target = $region8
    $region5: #{tpu_custom_call.1} parent=1 // loop_body
      %s31 = ssub.s32 %s26, 1
      %s32 = ssub.s32 %s26, 2
      %s33 = sadd.s32 %s26, 1
      %s34 = ssub.s32 %s26, %s33
      %p35 = scmp.eq.s32.totalorder %s34, 0
      %s37 = sadd.s32 %s36, 1
      %s38 = scalar_select %p35, %s36, %s37
      %p41 = pneg %p35
      %p42 = scmp.eq.s32.totalorder %s26, 1
      %p43 = por %p41, %p42
      %p44 = scmp.ne.s32.totalorder %s36, %s39
      %p45 = scmp.eq.s32.totalorder %s26, 0
      %p46 = por %p44, %p45
      %p47 = scmp.ne.s32.totalorder %s36, %s39
      %p48 = scmp.eq.s32.totalorder %s31, 1
      %p49 = por %p47, %p48
      %p50 = scmp.ne.s32.totalorder %s39, %s40
      %p51 = scmp.eq.s32.totalorder %s31, 0
      %p52 = por %p50, %p51
      %p53 = scmp.ne.s32.totalorder %s39, %s40
      %p54 = scmp.eq.s32.totalorder %s32, 1
      %p55 = por %p53, %p54
      %p57 = scmp.ne.s32.totalorder %s40, %s56
      %p58 = scmp.eq.s32.totalorder %s32, 0
      %p59 = por %p57, %p58
      %s61 = sadd.s32 %s60, 1
      %p64 = scmp.eq.s32.totalorder %s26, 1
      %p65 = scmp.ne.s32.totalorder %s60, %s62
      %p66 = scmp.eq.s32.totalorder %s26, 0
      %p67 = por %p65, %p66
      %p68 = scmp.ne.s32.totalorder %s60, %s62
      %p69 = scmp.eq.s32.totalorder %s31, 1
      %p70 = por %p68, %p69
      %p71 = scmp.ne.s32.totalorder %s62, %s63
      %p72 = scmp.eq.s32.totalorder %s31, 0
      %p73 = por %p71, %p72
      %p74 = scmp.ne.s32.totalorder %s62, %s63
      %p75 = scmp.eq.s32.totalorder %s32, 1
      %p76 = por %p74, %p75
      %p78 = scmp.ne.s32.totalorder %s63, %s77
      %p79 = scmp.eq.s32.totalorder %s32, 0
      %p80 = por %p78, %p79
      %s82 = sadd.s32 %s81, 1
      %p85 = scmp.eq.s32.totalorder %s26, 1
      %p86 = scmp.ne.s32.totalorder %s81, %s83
      %p87 = scmp.eq.s32.totalorder %s26, 0
      %p88 = por %p86, %p87
      %p89 = scmp.ne.s32.totalorder %s81, %s83
      %p90 = scmp.eq.s32.totalorder %s31, 1
      %p91 = por %p89, %p90
      %p92 = scmp.ne.s32.totalorder %s83, %s84
      %p93 = scmp.eq.s32.totalorder %s31, 0
      %p94 = por %p92, %p93
      %p95 = scmp.ne.s32.totalorder %s83, %s84
      %p96 = scmp.eq.s32.totalorder %s32, 1
      %p97 = por %p95, %p96
      %p99 = scmp.ne.s32.totalorder %s84, %s98
      %p100 = scmp.eq.s32.totalorder %s32, 0
      %p101 = por %p99, %p100
      %s103 = sadd.s32 %s102, 1
      %p106 = scmp.eq.s32.totalorder %s26, 1
      %p107 = scmp.ne.s32.totalorder %s102, %s104
      %p108 = scmp.eq.s32.totalorder %s26, 0
      %p109 = por %p107, %p108
      %p110 = scmp.ne.s32.totalorder %s102, %s104
      %p111 = scmp.eq.s32.totalorder %s31, 1
      %p112 = por %p110, %p111
      %p113 = scmp.ne.s32.totalorder %s104, %s105
      %p114 = scmp.eq.s32.totalorder %s31, 0
      %p115 = por %p113, %p114
      %p116 = scmp.ne.s32.totalorder %s104, %s105
      %p117 = scmp.eq.s32.totalorder %s32, 1
      %p118 = por %p116, %p117
      %p120 = scmp.ne.s32.totalorder %s105, %s119
      %p121 = scmp.eq.s32.totalorder %s32, 0
      %p122 = por %p120, %p121
      %s124 = sadd.s32 %s123, 1
      %p127 = scmp.eq.s32.totalorder %s26, 1
      %p128 = scmp.ne.s32.totalorder %s123, %s125
      %p129 = scmp.eq.s32.totalorder %s26, 0
      %p130 = por %p128, %p129
      %p131 = scmp.ne.s32.totalorder %s123, %s125
      %p132 = scmp.eq.s32.totalorder %s31, 1
      %p133 = por %p131, %p132
      %p134 = scmp.ne.s32.totalorder %s125, %s126
      %p135 = scmp.eq.s32.totalorder %s31, 0
      %p136 = por %p134, %p135
      %p137 = scmp.ne.s32.totalorder %s125, %s126
      %p138 = scmp.eq.s32.totalorder %s32, 1
      %p139 = por %p137, %p138
      %p141 = scmp.ne.s32.totalorder %s126, %s140
      %p142 = scmp.eq.s32.totalorder %s32, 0
      %p143 = por %p141, %p142
      %s145 = sadd.s32 %s144, 1
      %p148 = scmp.eq.s32.totalorder %s26, 1
      %p149 = scmp.ne.s32.totalorder %s144, %s146
      %p150 = scmp.eq.s32.totalorder %s26, 0
      %p151 = por %p149, %p150
      %p152 = scmp.ne.s32.totalorder %s144, %s146
      %p153 = scmp.eq.s32.totalorder %s31, 1
      %p154 = por %p152, %p153
      %p155 = scmp.ne.s32.totalorder %s146, %s147
      %p156 = scmp.eq.s32.totalorder %s31, 0
      %p157 = por %p155, %p156
      %p158 = scmp.ne.s32.totalorder %s146, %s147
      %p159 = scmp.eq.s32.totalorder %s32, 1
      %p160 = por %p158, %p159
      %p162 = scmp.ne.s32.totalorder %s147, %s161
      %p163 = scmp.eq.s32.totalorder %s32, 0
      %p164 = por %p162, %p163
      %s166 = sadd.s32 %s165, 1
      %p169 = scmp.eq.s32.totalorder %s26, 1
      %p170 = scmp.ne.s32.totalorder %s165, %s167
      %p171 = scmp.eq.s32.totalorder %s26, 0
      %p172 = por %p170, %p171
      %p173 = scmp.ne.s32.totalorder %s165, %s167
      %p174 = scmp.eq.s32.totalorder %s31, 1
      %p175 = por %p173, %p174
      %p176 = scmp.ne.s32.totalorder %s167, %s168
      %p177 = scmp.eq.s32.totalorder %s31, 0
      %p178 = por %p176, %p177
      %p179 = scmp.ne.s32.totalorder %s167, %s168
      %p180 = scmp.eq.s32.totalorder %s32, 1
      %p181 = por %p179, %p180
      %p183 = scmp.ne.s32.totalorder %s168, %s182
      %p184 = scmp.eq.s32.totalorder %s32, 0
      %p185 = por %p183, %p184
      %s187 = sadd.s32 %s186, 1
      %p190 = scmp.eq.s32.totalorder %s26, 1
      %p191 = scmp.ne.s32.totalorder %s186, %s188
      %p192 = scmp.eq.s32.totalorder %s26, 0
      %p193 = por %p191, %p192
      %p194 = scmp.ne.s32.totalorder %s186, %s188
      %p195 = scmp.eq.s32.totalorder %s31, 1
      %p196 = por %p194, %p195
      %p197 = scmp.ne.s32.totalorder %s188, %s189
      %p198 = scmp.eq.s32.totalorder %s31, 0
      %p199 = por %p197, %p198
      %p200 = scmp.ne.s32.totalorder %s188, %s189
      %p201 = scmp.eq.s32.totalorder %s32, 1
      %p202 = por %p200, %p201
      %p204 = scmp.ne.s32.totalorder %s189, %s203
      %p205 = scmp.eq.s32.totalorder %s32, 0
      %p206 = por %p204, %p205
      %s208 = sadd.s32 %s207, 1
      %p211 = scmp.eq.s32.totalorder %s26, 1
      %p212 = scmp.ne.s32.totalorder %s207, %s209
      %p213 = scmp.eq.s32.totalorder %s26, 0
      %p214 = por %p212, %p213
      %p215 = scmp.ne.s32.totalorder %s207, %s209
      %p216 = scmp.eq.s32.totalorder %s31, 1
      %p217 = por %p215, %p216
      %p218 = scmp.ne.s32.totalorder %s209, %s210
      %p219 = scmp.eq.s32.totalorder %s31, 0
      %p220 = por %p218, %p219
      %p221 = scmp.ne.s32.totalorder %s209, %s210
      %p222 = scmp.eq.s32.totalorder %s32, 1
      %p223 = por %p221, %p222
      %p225 = scmp.ne.s32.totalorder %s210, %s224
      %p226 = scmp.eq.s32.totalorder %s32, 0
      %p227 = por %p225, %p226
      %s229 = sadd.s32 %s228, 1
      %p232 = scmp.eq.s32.totalorder %s26, 1
      %p233 = scmp.ne.s32.totalorder %s228, %s230
      %p234 = scmp.eq.s32.totalorder %s26, 0
      %p235 = por %p233, %p234
      %p236 = scmp.ne.s32.totalorder %s228, %s230
      %p237 = scmp.eq.s32.totalorder %s31, 1
      %p238 = por %p236, %p237
      %p239 = scmp.ne.s32.totalorder %s230, %s231
      %p240 = scmp.eq.s32.totalorder %s31, 0
      %p241 = por %p239, %p240
      %p242 = scmp.ne.s32.totalorder %s230, %s231
      %p243 = scmp.eq.s32.totalorder %s32, 1
      %p244 = por %p242, %p243
      %p246 = scmp.ne.s32.totalorder %s231, %s245
      %p247 = scmp.eq.s32.totalorder %s32, 0
      %p248 = por %p246, %p247
      %s250 = sadd.s32 %s249, 1
      %p253 = scmp.eq.s32.totalorder %s26, 1
      %p254 = scmp.ne.s32.totalorder %s249, %s251
      %p255 = scmp.eq.s32.totalorder %s26, 0
      %p256 = por %p254, %p255
      %p257 = scmp.ne.s32.totalorder %s249, %s251
      %p258 = scmp.eq.s32.totalorder %s31, 1
      %p259 = por %p257, %p258
      %p260 = scmp.ne.s32.totalorder %s251, %s252
      %p261 = scmp.eq.s32.totalorder %s31, 0
      %p262 = por %p260, %p261
      %p263 = scmp.ne.s32.totalorder %s251, %s252
      %p264 = scmp.eq.s32.totalorder %s32, 1
      %p265 = por %p263, %p264
      %p267 = scmp.ne.s32.totalorder %s252, %s266
      %p268 = scmp.eq.s32.totalorder %s32, 0
      %p269 = por %p267, %p268
      %s270 = ssub.s32 %s26, %s33
      %p271 = scmp.eq.s32.totalorder %s270, 0
      %s273 = sadd.s32 %s272, 1
      %s274 = scalar_select %p271, %s272, %s273
      %p277 = pneg %p271
      %p278 = scmp.eq.s32.totalorder %s26, 1
      %p279 = por %p277, %p278
      %p280 = scmp.ne.s32.totalorder %s272, %s275
      %p281 = scmp.eq.s32.totalorder %s26, 0
      %p282 = por %p280, %p281
      %p283 = scmp.ne.s32.totalorder %s272, %s275
      %p284 = scmp.eq.s32.totalorder %s31, 1
      %p285 = por %p283, %p284
      %p286 = scmp.ne.s32.totalorder %s275, %s276
      %p287 = scmp.eq.s32.totalorder %s31, 0
      %p288 = por %p286, %p287
      %p289 = scmp.ne.s32.totalorder %s275, %s276
      %p290 = scmp.eq.s32.totalorder %s32, 1
      %p291 = por %p289, %p290
      %p293 = scmp.ne.s32.totalorder %s276, %s292
      %p294 = scmp.eq.s32.totalorder %s32, 0
      %p295 = por %p293, %p294
      %p296 = scmp.le.s32.totalorder 1, %s26
      %p297 = scmp.lt.s32.totalorder %s26, 3
      %p298 = pnand %p296, %p297
      %p299 = pneg %p298
      // Predicated region
      $region9: #{tpu_custom_call.1} parent=5 // pred_check
        _
      $region10: #{tpu_custom_call.1} parent=5 // pred_check_branch
        %301 = sbr.rel (%p298) target = $region12
      $region11: #{tpu_custom_call.1} parent=5 // pred_region
        %s302 = ssub.s32 %s26, 1
        // Predicated region
        $region13: #{tpu_custom_call.1} parent=11 // pred_check
          %p303 = pneg %p73
        $region14: #{tpu_custom_call.1} parent=11 // pred_check_branch
          %305 = sbr.rel (%p303) target = $region16
        $region15: #{tpu_custom_call.1} parent=11 // pred_region
          %s307 = ssub.s32 2048, 2048
          %308 = vsyncadd [#allocation6], %s307
          %s309 = sshll.u32 [#allocation5], 4
          %s310 = int_to_ptr.vmem [resolvable:$true] %s309
          %315 = dma.hbm_to_vmem [thread:$0]  %s1, 2048, %s310, [#allocation6], 128, 128, 8
        $region16: #{tpu_custom_call.1} parent=11 // pred_fallthru
          _
        // Predicated region
        $region17: #{tpu_custom_call.1} parent=11 // pred_check
          %p316 = pneg %p94
        $region18: #{tpu_custom_call.1} parent=11 // pred_check_branch
          %318 = sbr.rel (%p316) target = $region20
        $region19: #{tpu_custom_call.1} parent=11 // pred_region
          _
        $region20: #{tpu_custom_call.1} parent=11 // pred_fallthru
          _
        // Predicated region
        $region21: #{tpu_custom_call.1} parent=11 // pred_check
          %p319 = pneg %p115
        $region22: #{tpu_custom_call.1} parent=11 // pred_check_branch
          %321 = sbr.rel (%p319) target = $region24
        $region23: #{tpu_custom_call.1} parent=11 // pred_region
          %s323 = ssub.s32 2048, 2048
          %324 = vsyncadd [#allocation6], %s323
          %s325 = sshll.u32 [#allocation7], 4
          %s326 = int_to_ptr.vmem [resolvable:$true] %s325
          %331 = dma.hbm_to_vmem [thread:$0]  %s3, 2048, %s326, [#allocation6], 128, 128, 8
        $region24: #{tpu_custom_call.1} parent=11 // pred_fallthru
          _
        // Predicated region
        $region25: #{tpu_custom_call.1} parent=11 // pred_check
          %p332 = pneg %p136
        $region26: #{tpu_custom_call.1} parent=11 // pred_check_branch
          %334 = sbr.rel (%p332) target = $region28
        $region27: #{tpu_custom_call.1} parent=11 // pred_region
          _
        $region28: #{tpu_custom_call.1} parent=11 // pred_fallthru
          _
        // Predicated region
        $region29: #{tpu_custom_call.1} parent=11 // pred_check
          %p335 = pneg %p157
        $region30: #{tpu_custom_call.1} parent=11 // pred_check_branch
          %337 = sbr.rel (%p335) target = $region32
        $region31: #{tpu_custom_call.1} parent=11 // pred_region
          %s339 = ssub.s32 2048, 2048
          %340 = vsyncadd [#allocation9], %s339
          %s341 = sshll.u32 [#allocation8], 4
          %s342 = int_to_ptr.vmem [resolvable:$true] %s341
          %347 = dma.hbm_to_vmem [thread:$0]  %s5, 2048, %s342, [#allocation9], 128, 128, 8
        $region32: #{tpu_custom_call.1} parent=11 // pred_fallthru
          _
        // Predicated region
        $region33: #{tpu_custom_call.1} parent=11 // pred_check
          %p348 = pneg %p178
        $region34: #{tpu_custom_call.1} parent=11 // pred_check_branch
          %350 = sbr.rel (%p348) target = $region36
        $region35: #{tpu_custom_call.1} parent=11 // pred_region
          _
        $region36: #{tpu_custom_call.1} parent=11 // pred_fallthru
          _
        // Predicated region
        $region37: #{tpu_custom_call.1} parent=11 // pred_check
          %p351 = pneg %p199
        $region38: #{tpu_custom_call.1} parent=11 // pred_check_branch
          %353 = sbr.rel (%p351) target = $region40
        $region39: #{tpu_custom_call.1} parent=11 // pred_region
          %s355 = ssub.s32 2048, 2048
          %356 = vsyncadd [#allocation9], %s355
          %s357 = sshll.u32 [#allocation10], 4
          %s358 = int_to_ptr.vmem [resolvable:$true] %s357
          %363 = dma.hbm_to_vmem [thread:$0]  %s7, 2048, %s358, [#allocation9], 128, 128, 8
        $region40: #{tpu_custom_call.1} parent=11 // pred_fallthru
          _
        // Predicated region
        $region41: #{tpu_custom_call.1} parent=11 // pred_check
          %p364 = pneg %p220
        $region42: #{tpu_custom_call.1} parent=11 // pred_check_branch
          %366 = sbr.rel (%p364) target = $region44
        $region43: #{tpu_custom_call.1} parent=11 // pred_region
          _
        $region44: #{tpu_custom_call.1} parent=11 // pred_fallthru
          _
        // Predicated region
        $region45: #{tpu_custom_call.1} parent=11 // pred_check
          %p367 = pneg %p241
        $region46: #{tpu_custom_call.1} parent=11 // pred_check_branch
          %369 = sbr.rel (%p367) target = $region48
        $region47: #{tpu_custom_call.1} parent=11 // pred_region
          %s371 = ssub.s32 2048, 2048
          %372 = vsyncadd [#allocation12], %s371
          %s373 = sshll.u32 [#allocation11], 4
          %s374 = int_to_ptr.vmem [resolvable:$true] %s373
          %379 = dma.hbm_to_vmem [thread:$0]  %s9, 2048, %s374, [#allocation12], 128, 128, 8
        $region48: #{tpu_custom_call.1} parent=11 // pred_fallthru
          _
        // Predicated region
        $region49: #{tpu_custom_call.1} parent=11 // pred_check
          %p380 = pneg %p262
        $region50: #{tpu_custom_call.1} parent=11 // pred_check_branch
          %382 = sbr.rel (%p380) target = $region52
        $region51: #{tpu_custom_call.1} parent=11 // pred_region
          _
        $region52: #{tpu_custom_call.1} parent=11 // pred_fallthru
          _
      $region12: #{tpu_custom_call.1} parent=5 // pred_fallthru
        _
      %p383 = scmp.lt.s32.totalorder %s26, 2
      // Predicated region
      $region53: #{tpu_custom_call.1} parent=5 // pred_check
        %p384 = pneg %p383
      $region54: #{tpu_custom_call.1} parent=5 // pred_check_branch
        %386 = sbr.rel (%p384) target = $region56
      $region55: #{tpu_custom_call.1} parent=5 // pred_region
        // Predicated region
        $region57: #{tpu_custom_call.1} parent=55 // pred_check
          %p387 = pneg %p46
        $region58: #{tpu_custom_call.1} parent=55 // pred_check_branch
          %389 = sbr.rel (%p387) target = $region60
        $region59: #{tpu_custom_call.1} parent=55 // pred_region
          %s390 = sand.u32 %s36, 1
          %s391 = scalar_lea.sflag [#allocation3], %s390
          %s392 = sand.u32 %s36, 1
          %s393 = smul.addr %s392, 256
          %s394 = scalar_lea.vmem [#allocation2], %s393
          %s395 = smul.u32 32, %s26
          %s397 = ssub.s32 4096, 4096
          %398 = vsyncadd %s391, %s397
          %s399 = smul.addr %s395, 128
          %s400 = scalar_lea.hbm %s0, %s399
          %s401 = sshll.u32 %s394, 4
          %s402 = int_to_ptr.vmem [resolvable:$true] %s401
          %407 = dma.hbm_to_vmem [thread:$0]  %s400, 4096, %s402, %s391, 128, 128, 8
        $region60: #{tpu_custom_call.1} parent=55 // pred_fallthru
          _
      $region56: #{tpu_custom_call.1} parent=5 // pred_fallthru
        _
      %p408 = scmp.le.s32.totalorder 1, %s26
      %p409 = scmp.lt.s32.totalorder %s26, 3
      %p410 = pnand %p408, %p409
      %p411 = pneg %p410
      // Predicated region
      $region61: #{tpu_custom_call.1} parent=5 // pred_check
        _
      $region62: #{tpu_custom_call.1} parent=5 // pred_check_branch
        %413 = sbr.rel (%p410) target = $region64
      $region63: #{tpu_custom_call.1} parent=5 // pred_region
        %s414 = ssub.s32 %s26, 1
        %s415 = sand.u32 %s39, 1
        %s416 = scalar_lea.sflag [#allocation3], %s415
        %s417 = sand.u32 %s39, 1
        %s418 = smul.addr %s417, 256
        %s419 = scalar_lea.vmem [#allocation2], %s418
        // Predicated region
        $region65: #{tpu_custom_call.1} parent=63 // pred_check
          %p420 = pneg %p52
        $region66: #{tpu_custom_call.1} parent=63 // pred_check_branch
          %422 = sbr.rel (%p420) target = $region68
        $region67: #{tpu_custom_call.1} parent=63 // pred_region
          %423 = dma.done %s416, 4096
        $region68: #{tpu_custom_call.1} parent=63 // pred_fallthru
          _
        // Predicated region
        $region69: #{tpu_custom_call.1} parent=63 // pred_check
          %p424 = pneg %p73
        $region70: #{tpu_custom_call.1} parent=63 // pred_check_branch
          %426 = sbr.rel (%p424) target = $region72
        $region71: #{tpu_custom_call.1} parent=63 // pred_region
          %427 = dma.done [#allocation6], 2048
        $region72: #{tpu_custom_call.1} parent=63 // pred_fallthru
          _
        // Predicated region
        $region73: #{tpu_custom_call.1} parent=63 // pred_check
          %p428 = pneg %p115
        $region74: #{tpu_custom_call.1} parent=63 // pred_check_branch
          %430 = sbr.rel (%p428) target = $region76
        $region75: #{tpu_custom_call.1} parent=63 // pred_region
          %431 = dma.done [#allocation6], 2048
        $region76: #{tpu_custom_call.1} parent=63 // pred_fallthru
          _
        // Predicated region
        $region77: #{tpu_custom_call.1} parent=63 // pred_check
          %p432 = pneg %p157
        $region78: #{tpu_custom_call.1} parent=63 // pred_check_branch
          %434 = sbr.rel (%p432) target = $region80
        $region79: #{tpu_custom_call.1} parent=63 // pred_region
          %435 = dma.done [#allocation9], 2048
        $region80: #{tpu_custom_call.1} parent=63 // pred_fallthru
          _
        // Predicated region
        $region81: #{tpu_custom_call.1} parent=63 // pred_check
          %p436 = pneg %p199
        $region82: #{tpu_custom_call.1} parent=63 // pred_check_branch
          %438 = sbr.rel (%p436) target = $region84
        $region83: #{tpu_custom_call.1} parent=63 // pred_region
          %439 = dma.done [#allocation9], 2048
        $region84: #{tpu_custom_call.1} parent=63 // pred_fallthru
          _
        // Predicated region
        $region85: #{tpu_custom_call.1} parent=63 // pred_check
          %p440 = pneg %p241
        $region86: #{tpu_custom_call.1} parent=63 // pred_check_branch
          %442 = sbr.rel (%p440) target = $region88
        $region87: #{tpu_custom_call.1} parent=63 // pred_region
          %443 = dma.done [#allocation12], 2048
        $region88: #{tpu_custom_call.1} parent=63 // pred_fallthru
          _
        %s444 = sand.u32 %s39, 1
        %s445 = scalar_lea.sflag [#allocation3], %s444
        %s446 = sand.u32 %s39, 1
        %s447 = smul.addr %s446, 256
        %s448 = scalar_lea.vmem [#allocation2], %s447
        %p449 = pneg %p52
        %p450 = pneg %p49
        %p451 = pneg %p73
        %p452 = pneg %p70
        %p453 = pneg %p94
        %p454 = pneg %p91
        %p455 = pneg %p115
        %p456 = pneg %p112
        %p457 = pneg %p136
        %p458 = pneg %p133
        %p459 = pneg %p157
        %p460 = pneg %p154
        %p461 = pneg %p178
        %p462 = pneg %p175
        %p463 = pneg %p199
        %p464 = pneg %p196
        %p465 = pneg %p220
        %p466 = pneg %p217
        %p467 = pneg %p241
        %p468 = pneg %p238
        %p469 = pneg %p262
        %p470 = pneg %p259
        %p471 = pneg %p288
        %p472 = pneg %p285
        %s473 = sand.u32 %s275, 1
        %s474 = scalar_lea.sflag [#allocation4], %s473
        %s475 = sand.u32 %s275, 1
        %s476 = smul.addr %s475, 256
        %s477 = scalar_lea.vmem [#allocation13], %s476
        %s478 = smul.u32 32, %s31
        %s479 = smul.u32 32, %s31
        %v480 = vld [vmem:[%s419] sm:$0xff]
        %v481 = vld [vmem:[%s419 + $0x8] sm:$0xff]
        %v482 = vld [vmem:[%s419 + $0x10] sm:$0xff]
        %v483 = vld [vmem:[%s419 + $0x18] sm:$0xff]
        %v484 = vld [vmem:[%s419 + $0x20] sm:$0xff]
        %v485 = vld [vmem:[%s419 + $0x28] sm:$0xff]
        %v486 = vld [vmem:[%s419 + $0x30] sm:$0xff]
        %v487 = vld [vmem:[%s419 + $0x38] sm:$0xff]
        %v488 = vld [vmem:[%s419 + $0x40] sm:$0xff]
        %v489 = vld [vmem:[%s419 + $0x48] sm:$0xff]
        %v490 = vld [vmem:[%s419 + $0x50] sm:$0xff]
        %v491 = vld [vmem:[%s419 + $0x58] sm:$0xff]
        %v492 = vld [vmem:[%s419 + $0x60] sm:$0xff]
        %v493 = vld [vmem:[%s419 + $0x68] sm:$0xff]
        %v494 = vld [vmem:[%s419 + $0x70] sm:$0xff]
        %v495 = vld [vmem:[%s419 + $0x78] sm:$0xff]
        %v496 = vld [vmem:[%s419 + $0x80] sm:$0xff]
        %v497 = vld [vmem:[%s419 + $0x88] sm:$0xff]
        %v498 = vld [vmem:[%s419 + $0x90] sm:$0xff]
        %v499 = vld [vmem:[%s419 + $0x98] sm:$0xff]
        %v500 = vld [vmem:[%s419 + $0xa0] sm:$0xff]
        %v501 = vld [vmem:[%s419 + $0xa8] sm:$0xff]
        %v502 = vld [vmem:[%s419 + $0xb0] sm:$0xff]
        %v503 = vld [vmem:[%s419 + $0xb8] sm:$0xff]
        %v504 = vld [vmem:[%s419 + $0xc0] sm:$0xff]
        %v505 = vld [vmem:[%s419 + $0xc8] sm:$0xff]
        %v506 = vld [vmem:[%s419 + $0xd0] sm:$0xff]
        %v507 = vld [vmem:[%s419 + $0xd8] sm:$0xff]
        %v508 = vld [vmem:[%s419 + $0xe0] sm:$0xff]
        %v509 = vld [vmem:[%s419 + $0xe8] sm:$0xff]
        %v510 = vld [vmem:[%s419 + $0xf0] sm:$0xff]
        %v511 = vld [vmem:[%s419 + $0xf8] sm:$0xff]
        %v512 = vld [vmem:[#allocation5] sm:$0xff]
        %v513 = vld [vmem:[#allocation5 + $0x8] sm:$0xff]
        %v514 = vld [vmem:[#allocation5 + $0x10] sm:$0xff]
        %v515 = vld [vmem:[#allocation5 + $0x18] sm:$0xff]
        %v516 = vld [vmem:[#allocation5 + $0x20] sm:$0xff]
        %v517 = vld [vmem:[#allocation5 + $0x28] sm:$0xff]
        %v518 = vld [vmem:[#allocation5 + $0x30] sm:$0xff]
        %v519 = vld [vmem:[#allocation5 + $0x38] sm:$0xff]
        %v520 = vld [vmem:[#allocation5 + $0x40] sm:$0xff]
        %v521 = vld [vmem:[#allocation5 + $0x48] sm:$0xff]
        %v522 = vld [vmem:[#allocation5 + $0x50] sm:$0xff]
        %v523 = vld [vmem:[#allocation5 + $0x58] sm:$0xff]
        %v524 = vld [vmem:[#allocation5 + $0x60] sm:$0xff]
        %v525 = vld [vmem:[#allocation5 + $0x68] sm:$0xff]
        %v526 = vld [vmem:[#allocation5 + $0x70] sm:$0xff]
        %v527 = vld [vmem:[#allocation5 + $0x78] sm:$0xff]
        %v528 = vld [vmem:[%s2] sm:$0x1]
        %v530 = vlaneseq
        %v531 = vshrl.u32 %v530, 7
        %v532 = vsub.s32 0, %v531
        %v533 = vrot.slane %v528, %v532
        %535 = vmatprep.subr.mxu0 0.0
        %536 = vmatpush1.msra.mxu0 %v512
        %537 = vmatprep.subr.mxu0 0.0
        %538 = vmatpush1.msra.mxu0 %v513
        %539 = vmatprep.subr.mxu0 0.0
        %540 = vmatpush1.msra.mxu0 %v514
        %541 = vmatprep.subr.mxu0 0.0
        %542 = vmatpush1.msra.mxu0 %v515
        %543 = vmatprep.subr.mxu0 0.0
        %544 = vmatpush1.msra.mxu0 %v516
        %545 = vmatprep.subr.mxu0 0.0
        %546 = vmatpush1.msra.mxu0 %v517
        %547 = vmatprep.subr.mxu0 0.0
        %548 = vmatpush1.msra.mxu0 %v518
        %549 = vmatprep.subr.mxu0 0.0
        %550 = vmatpush1.msra.mxu0 %v519
        %551 = vmatprep.subr.mxu0 0.0
        %552 = vmatpush1.msra.mxu0 %v520
        %553 = vmatprep.subr.mxu0 0.0
        %554 = vmatpush1.msra.mxu0 %v521
        %555 = vmatprep.subr.mxu0 0.0
        %556 = vmatpush1.msra.mxu0 %v522
        %557 = vmatprep.subr.mxu0 0.0
        %558 = vmatpush1.msra.mxu0 %v523
        %559 = vmatprep.subr.mxu0 0.0
        %560 = vmatpush1.msra.mxu0 %v524
        %561 = vmatprep.subr.mxu0 0.0
        %562 = vmatpush1.msra.mxu0 %v525
        %563 = vmatprep.subr.mxu0 0.0
        %564 = vmatpush1.msra.mxu0 %v526
        %565 = vmatprep.subr.mxu0 0.0
        %566 = vmatpush1.msra.mxu0 %v527
        %567 = vmatprep.subr.mxu0 0.0
        %568 = vmatpush1.msra.mxu0 0.0
        %569 = vmatprep.subr.mxu0 0.0
        %570 = vmatpush1.msra.mxu0 0.0
        %571 = vmatprep.subr.mxu0 0.0
        %572 = vmatpush1.msra.mxu0 0.0
        %573 = vmatprep.subr.mxu0 0.0
        %574 = vmatpush1.msra.mxu0 0.0
        %575 = vmatprep.subr.mxu0 0.0
        %576 = vmatpush1.msra.mxu0 0.0
        %577 = vmatprep.subr.mxu0 0.0
        %578 = vmatpush1.msra.mxu0 0.0
        %579 = vmatprep.subr.mxu0 0.0
        %580 = vmatpush1.msra.mxu0 0.0
        %581 = vmatprep.subr.mxu0 0.0
        %582 = vmatpush1.msra.mxu0 0.0
        %583 = vmatprep.subr.mxu0 0.0
        %584 = vmatpush1.msra.mxu0 0.0
        %585 = vmatprep.subr.mxu0 0.0
        %586 = vmatpush1.msra.mxu0 0.0
        %587 = vmatprep.subr.mxu0 0.0
        %588 = vmatpush1.msra.mxu0 0.0
        %589 = vmatprep.subr.mxu0 0.0
        %590 = vmatpush1.msra.mxu0 0.0
        %591 = vmatprep.subr.mxu0 0.0
        %592 = vmatpush1.msra.mxu0 0.0
        %593 = vmatprep.subr.mxu0 0.0
        %594 = vmatpush1.msra.mxu0 0.0
        %595 = vmatprep.subr.mxu0 0.0
        %596 = vmatpush1.msra.mxu0 0.0
        %597 = vmatprep.subr.mxu0 0.0
        %598 = vmatpush1.msra.mxu0 0.0
        %599 = vmatprep.mubr.f32.mxu0 0.0
        %600 = vmatmul.mubr.f32.gmra.mrb[0].mxu0 %v480
        %v601 = vpop.f32.mrb[0].mxu0
        %v602 = vadd.f32 %v533, %v601
        %v603 = vpop.f32.mrb[0].mxu0
        %604 = vmatprep.mubr.f32.mxu0 0.0
        %605 = vmatmul.mubr.f32.gmra.mrb[0].mxu0 %v481
        %v606 = vpop.f32.mrb[0].mxu0
        %v607 = vadd.f32 %v533, %v606
        %v608 = vpop.f32.mrb[0].mxu0
        %609 = vmatprep.mubr.f32.mxu0 0.0
        %610 = vmatmul.mubr.f32.gmra.mrb[0].mxu0 %v482
        %v611 = vpop.f32.mrb[0].mxu0
        %v612 = vadd.f32 %v533, %v611
        %v613 = vpop.f32.mrb[0].mxu0
        %614 = vmatprep.mubr.f32.mxu0 0.0
        %615 = vmatmul.mubr.f32.gmra.mrb[0].mxu0 %v483
        %v616 = vpop.f32.mrb[0].mxu0
        %v617 = vadd.f32 %v533, %v616
        %v618 = vpop.f32.mrb[0].mxu0
        %619 = vmatprep.mubr.f32.mxu0 0.0
        %620 = vmatmul.mubr.f32.gmra.mrb[0].mxu0 %v484
        %v621 = vpop.f32.mrb[0].mxu0
        %v622 = vadd.f32 %v533, %v621
        %v623 = vpop.f32.mrb[0].mxu0
        %624 = vmatprep.mubr.f32.mxu0 0.0
        %625 = vmatmul.mubr.f32.gmra.mrb[0].mxu0 %v485
        %v626 = vpop.f32.mrb[0].mxu0
        %v627 = vadd.f32 %v533, %v626
        %v628 = vpop.f32.mrb[0].mxu0
        %629 = vmatprep.mubr.f32.mxu0 0.0
        %630 = vmatmul.mubr.f32.gmra.mrb[0].mxu0 %v486
        %v631 = vpop.f32.mrb[0].mxu0
        %v632 = vadd.f32 %v533, %v631
        %v633 = vpop.f32.mrb[0].mxu0
        %634 = vmatprep.mubr.f32.mxu0 0.0
        %635 = vmatmul.mubr.f32.gmra.mrb[0].mxu0 %v487
        %v636 = vpop.f32.mrb[0].mxu0
        %v637 = vadd.f32 %v533, %v636
        %v638 = vpop.f32.mrb[0].mxu0
        %639 = vmatprep.mubr.f32.mxu0 0.0
        %640 = vmatmul.mubr.f32.gmra.mrb[0].mxu0 %v488
        %v641 = vpop.f32.mrb[0].mxu0
        %v642 = vadd.f32 %v533, %v641
        %v643 = vpop.f32.mrb[0].mxu0
        %644 = vmatprep.mubr.f32.mxu0 0.0
        %645 = vmatmul.mubr.f32.gmra.mrb[0].mxu0 %v489
        %v646 = vpop.f32.mrb[0].mxu0
        %v647 = vadd.f32 %v533, %v646
        %v648 = vpop.f32.mrb[0].mxu0
        %649 = vmatprep.mubr.f32.mxu0 0.0
        %650 = vmatmul.mubr.f32.gmra.mrb[0].mxu0 %v490
        %v651 = vpop.f32.mrb[0].mxu0
        %v652 = vadd.f32 %v533, %v651
        %v653 = vpop.f32.mrb[0].mxu0
        %654 = vmatprep.mubr.f32.mxu0 0.0
        %655 = vmatmul.mubr.f32.gmra.mrb[0].mxu0 %v491
        %v656 = vpop.f32.mrb[0].mxu0
        %v657 = vadd.f32 %v533, %v656
        %v658 = vpop.f32.mrb[0].mxu0
        %659 = vmatprep.mubr.f32.mxu0 0.0
        %660 = vmatmul.mubr.f32.gmra.mrb[0].mxu0 %v492
        %v661 = vpop.f32.mrb[0].mxu0
        %v662 = vadd.f32 %v533, %v661
        %v663 = vpop.f32.mrb[0].mxu0
        %664 = vmatprep.mubr.f32.mxu0 0.0
        %665 = vmatmul.mubr.f32.gmra.mrb[0].mxu0 %v493
        %v666 = vpop.f32.mrb[0].mxu0
        %v667 = vadd.f32 %v533, %v666
        %v668 = vpop.f32.mrb[0].mxu0
        %669 = vmatprep.mubr.f32.mxu0 0.0
        %670 = vmatmul.mubr.f32.gmra.mrb[0].mxu0 %v494
        %v671 = vpop.f32.mrb[0].mxu0
        %v672 = vadd.f32 %v533, %v671
        %v673 = vpop.f32.mrb[0].mxu0
        %674 = vmatprep.mubr.f32.mxu0 0.0
        %675 = vmatmul.mubr.f32.gmra.mrb[0].mxu0 %v495
        %v676 = vpop.f32.mrb[0].mxu0
        %v677 = vadd.f32 %v533, %v676
        %v678 = vpop.f32.mrb[0].mxu0
        %679 = vmatprep.mubr.f32.mxu0 0.0
        %680 = vmatmul.mubr.f32.gmra.mrb[0].mxu0 %v496
        %v681 = vpop.f32.mrb[0].mxu0
        %v682 = vadd.f32 %v533, %v681
        %v683 = vpop.f32.mrb[0].mxu0
        %684 = vmatprep.mubr.f32.mxu0 0.0
        %685 = vmatmul.mubr.f32.gmra.mrb[0].mxu0 %v497
        %v686 = vpop.f32.mrb[0].mxu0
        %v687 = vadd.f32 %v533, %v686
        %v688 = vpop.f32.mrb[0].mxu0
        %689 = vmatprep.mubr.f32.mxu0 0.0
        %690 = vmatmul.mubr.f32.gmra.mrb[0].mxu0 %v498
        %v691 = vpop.f32.mrb[0].mxu0
        %v692 = vadd.f32 %v533, %v691
        %v693 = vpop.f32.mrb[0].mxu0
        %694 = vmatprep.mubr.f32.mxu0 0.0
        %695 = vmatmul.mubr.f32.gmra.mrb[0].mxu0 %v499
        %v696 = vpop.f32.mrb[0].mxu0
        %v697 = vadd.f32 %v533, %v696
        %v698 = vpop.f32.mrb[0].mxu0
        %699 = vmatprep.mubr.f32.mxu0 0.0
        %700 = vmatmul.mubr.f32.gmra.mrb[0].mxu0 %v500
        %v701 = vpop.f32.mrb[0].mxu0
        %v702 = vadd.f32 %v533, %v701
        %v703 = vpop.f32.mrb[0].mxu0
        %704 = vmatprep.mubr.f32.mxu0 0.0
        %705 = vmatmul.mubr.f32.gmra.mrb[0].mxu0 %v501
        %v706 = vpop.f32.mrb[0].mxu0
        %v707 = vadd.f32 %v533, %v706
        %v708 = vpop.f32.mrb[0].mxu0
        %709 = vmatprep.mubr.f32.mxu0 0.0
        %710 = vmatmul.mubr.f32.gmra.mrb[0].mxu0 %v502
        %v711 = vpop.f32.mrb[0].mxu0
        %v712 = vadd.f32 %v533, %v711
        %v713 = vpop.f32.mrb[0].mxu0
        %714 = vmatprep.mubr.f32.mxu0 0.0
        %715 = vmatmul.mubr.f32.gmra.mrb[0].mxu0 %v503
        %v716 = vpop.f32.mrb[0].mxu0
        %v717 = vadd.f32 %v533, %v716
        %v718 = vpop.f32.mrb[0].mxu0
        %719 = vmatprep.mubr.f32.mxu0 0.0
        %720 = vmatmul.mubr.f32.gmra.mrb[0].mxu0 %v504
        %v721 = vpop.f32.mrb[0].mxu0
        %v722 = vadd.f32 %v533, %v721
        %v723 = vpop.f32.mrb[0].mxu0
        %724 = vmatprep.mubr.f32.mxu0 0.0
        %725 = vmatmul.mubr.f32.gmra.mrb[0].mxu0 %v505
        %v726 = vpop.f32.mrb[0].mxu0
        %v727 = vadd.f32 %v533, %v726
        %v728 = vpop.f32.mrb[0].mxu0
        %729 = vmatprep.mubr.f32.mxu0 0.0
        %730 = vmatmul.mubr.f32.gmra.mrb[0].mxu0 %v506
        %v731 = vpop.f32.mrb[0].mxu0
        %v732 = vadd.f32 %v533, %v731
        %v733 = vpop.f32.mrb[0].mxu0
        %734 = vmatprep.mubr.f32.mxu0 0.0
        %735 = vmatmul.mubr.f32.gmra.mrb[0].mxu0 %v507
        %v736 = vpop.f32.mrb[0].mxu0
        %v737 = vadd.f32 %v533, %v736
        %v738 = vpop.f32.mrb[0].mxu0
        %739 = vmatprep.mubr.f32.mxu0 0.0
        %740 = vmatmul.mubr.f32.gmra.mrb[0].mxu0 %v508
        %v741 = vpop.f32.mrb[0].mxu0
        %v742 = vadd.f32 %v533, %v741
        %v743 = vpop.f32.mrb[0].mxu0
        %744 = vmatprep.mubr.f32.mxu0 0.0
        %745 = vmatmul.mubr.f32.gmra.mrb[0].mxu0 %v509
        %v746 = vpop.f32.mrb[0].mxu0
        %v747 = vadd.f32 %v533, %v746
        %v748 = vpop.f32.mrb[0].mxu0
        %749 = vmatprep.mubr.f32.mxu0 0.0
        %750 = vmatmul.mubr.f32.gmra.mrb[0].mxu0 %v510
        %v751 = vpop.f32.mrb[0].mxu0
        %v752 = vadd.f32 %v533, %v751
        %v753 = vpop.f32.mrb[0].mxu0
        %754 = vmatprep.mubr.f32.mxu0 0.0
        %755 = vmatmul.mubr.f32.gmra.mrb[0].mxu0 %v511
        %v756 = vpop.f32.mrb[0].mxu0
        %v757 = vadd.f32 %v533, %v756
        %v758 = vpop.f32.mrb[0].mxu0
        %759 = vdwg.mxu0
        %vm760 = vcmp.gt.f32.partialorder %v602, 0.0
        %vm761 = vcmp.gt.f32.partialorder %v607, 0.0
        %vm762 = vcmp.gt.f32.partialorder %v612, 0.0
        %vm763 = vcmp.gt.f32.partialorder %v617, 0.0
        %vm764 = vcmp.gt.f32.partialorder %v622, 0.0
        %vm765 = vcmp.gt.f32.partialorder %v627, 0.0
        %vm766 = vcmp.gt.f32.partialorder %v632, 0.0
        %vm767 = vcmp.gt.f32.partialorder %v637, 0.0
        %vm768 = vcmp.gt.f32.partialorder %v642, 0.0
        %vm769 = vcmp.gt.f32.partialorder %v647, 0.0
        %vm770 = vcmp.gt.f32.partialorder %v652, 0.0
        %vm771 = vcmp.gt.f32.partialorder %v657, 0.0
        %vm772 = vcmp.gt.f32.partialorder %v662, 0.0
        %vm773 = vcmp.gt.f32.partialorder %v667, 0.0
        %vm774 = vcmp.gt.f32.partialorder %v672, 0.0
        %vm775 = vcmp.gt.f32.partialorder %v677, 0.0
        %vm776 = vcmp.gt.f32.partialorder %v682, 0.0
        %vm777 = vcmp.gt.f32.partialorder %v687, 0.0
        %vm778 = vcmp.gt.f32.partialorder %v692, 0.0
        %vm779 = vcmp.gt.f32.partialorder %v697, 0.0
        %vm780 = vcmp.gt.f32.partialorder %v702, 0.0
        %vm781 = vcmp.gt.f32.partialorder %v707, 0.0
        %vm782 = vcmp.gt.f32.partialorder %v712, 0.0
        %vm783 = vcmp.gt.f32.partialorder %v717, 0.0
        %vm784 = vcmp.gt.f32.partialorder %v722, 0.0
        %vm785 = vcmp.gt.f32.partialorder %v727, 0.0
        %vm786 = vcmp.gt.f32.partialorder %v732, 0.0
        %vm787 = vcmp.gt.f32.partialorder %v737, 0.0
        %vm788 = vcmp.gt.f32.partialorder %v742, 0.0
        %vm789 = vcmp.gt.f32.partialorder %v747, 0.0
        %vm790 = vcmp.gt.f32.partialorder %v752, 0.0
        %vm791 = vcmp.gt.f32.partialorder %v757, 0.0
        %v792 = vmul.f32 %v602, 0.01
        %v793 = vmul.f32 %v607, 0.01
        %v794 = vmul.f32 %v612, 0.01
        %v795 = vmul.f32 %v617, 0.01
        %v796 = vmul.f32 %v622, 0.01
        %v797 = vmul.f32 %v627, 0.01
        %v798 = vmul.f32 %v632, 0.01
        %v799 = vmul.f32 %v637, 0.01
        %v800 = vmul.f32 %v642, 0.01
        %v801 = vmul.f32 %v647, 0.01
        %v802 = vmul.f32 %v652, 0.01
        %v803 = vmul.f32 %v657, 0.01
        %v804 = vmul.f32 %v662, 0.01
        %v805 = vmul.f32 %v667, 0.01
        %v806 = vmul.f32 %v672, 0.01
        %v807 = vmul.f32 %v677, 0.01
        %v808 = vmul.f32 %v682, 0.01
        %v809 = vmul.f32 %v687, 0.01
        %v810 = vmul.f32 %v692, 0.01
        %v811 = vmul.f32 %v697, 0.01
        %v812 = vmul.f32 %v702, 0.01
        %v813 = vmul.f32 %v707, 0.01
        %v814 = vmul.f32 %v712, 0.01
        %v815 = vmul.f32 %v717, 0.01
        %v816 = vmul.f32 %v722, 0.01
        %v817 = vmul.f32 %v727, 0.01
        %v818 = vmul.f32 %v732, 0.01
        %v819 = vmul.f32 %v737, 0.01
        %v820 = vmul.f32 %v742, 0.01
        %v821 = vmul.f32 %v747, 0.01
        %v822 = vmul.f32 %v752, 0.01
        %v823 = vmul.f32 %v757, 0.01
        %v824 = vsel %vm760, %v602, %v792
        %v825 = vsel %vm761, %v607, %v793
        %v826 = vsel %vm762, %v612, %v794
        %v827 = vsel %vm763, %v617, %v795
        %v828 = vsel %vm764, %v622, %v796
        %v829 = vsel %vm765, %v627, %v797
        %v830 = vsel %vm766, %v632, %v798
        %v831 = vsel %vm767, %v637, %v799
        %v832 = vsel %vm768, %v642, %v800
        %v833 = vsel %vm769, %v647, %v801
        %v834 = vsel %vm770, %v652, %v802
        %v835 = vsel %vm771, %v657, %v803
        %v836 = vsel %vm772, %v662, %v804
        %v837 = vsel %vm773, %v667, %v805
        %v838 = vsel %vm774, %v672, %v806
        %v839 = vsel %vm775, %v677, %v807
        %v840 = vsel %vm776, %v682, %v808
        %v841 = vsel %vm777, %v687, %v809
        %v842 = vsel %vm778, %v692, %v810
        %v843 = vsel %vm779, %v697, %v811
        %v844 = vsel %vm780, %v702, %v812
        %v845 = vsel %vm781, %v707, %v813
        %v846 = vsel %vm782, %v712, %v814
        %v847 = vsel %vm783, %v717, %v815
        %v848 = vsel %vm784, %v722, %v816
        %v849 = vsel %vm785, %v727, %v817
        %v850 = vsel %vm786, %v732, %v818
        %v851 = vsel %vm787, %v737, %v819
        %v852 = vsel %vm788, %v742, %v820
        %v853 = vsel %vm789, %v747, %v821
        %v854 = vsel %vm790, %v752, %v822
        %v855 = vsel %vm791, %v757, %v823
        %v856 = vld [vmem:[#allocation7] sm:$0xff]
        %v857 = vld [vmem:[#allocation7 + $0x8] sm:$0xff]
        %v858 = vld [vmem:[#allocation7 + $0x10] sm:$0xff]
        %v859 = vld [vmem:[#allocation7 + $0x18] sm:$0xff]
        %v860 = vld [vmem:[#allocation7 + $0x20] sm:$0xff]
        %v861 = vld [vmem:[#allocation7 + $0x28] sm:$0xff]
        %v862 = vld [vmem:[#allocation7 + $0x30] sm:$0xff]
        %v863 = vld [vmem:[#allocation7 + $0x38] sm:$0xff]
        %v864 = vld [vmem:[#allocation7 + $0x40] sm:$0xff]
        %v865 = vld [vmem:[#allocation7 + $0x48] sm:$0xff]
        %v866 = vld [vmem:[#allocation7 + $0x50] sm:$0xff]
        %v867 = vld [vmem:[#allocation7 + $0x58] sm:$0xff]
        %v868 = vld [vmem:[#allocation7 + $0x60] sm:$0xff]
        %v869 = vld [vmem:[#allocation7 + $0x68] sm:$0xff]
        %v870 = vld [vmem:[#allocation7 + $0x70] sm:$0xff]
        %v871 = vld [vmem:[#allocation7 + $0x78] sm:$0xff]
        %v872 = vld [vmem:[%s4] sm:$0x1]
        %v874 = vlaneseq
        %v875 = vshrl.u32 %v874, 7
        %v876 = vsub.s32 0, %v875
        %v877 = vrot.slane %v872, %v876
        %879 = vmatprep.subr.mxu0 0.0
        %880 = vmatpush1.msra.mxu0 %v856
        %881 = vmatprep.subr.mxu0 0.0
        %882 = vmatpush1.msra.mxu0 %v857
        %883 = vmatprep.subr.mxu0 0.0
        %884 = vmatpush1.msra.mxu0 %v858
        %885 = vmatprep.subr.mxu0 0.0
        %886 = vmatpush1.msra.mxu0 %v859
        %887 = vmatprep.subr.mxu0 0.0
        %888 = vmatpush1.msra.mxu0 %v860
        %889 = vmatprep.subr.mxu0 0.0
        %890 = vmatpush1.msra.mxu0 %v861
        %891 = vmatprep.subr.mxu0 0.0
        %892 = vmatpush1.msra.mxu0 %v862
        %893 = vmatprep.subr.mxu0 0.0
        %894 = vmatpush1.msra.mxu0 %v863
        %895 = vmatprep.subr.mxu0 0.0
        %896 = vmatpush1.msra.mxu0 %v864
        %897 = vmatprep.subr.mxu0 0.0
        %898 = vmatpush1.msra.mxu0 %v865
        %899 = vmatprep.subr.mxu0 0.0
        %900 = vmatpush1.msra.mxu0 %v866
        %901 = vmatprep.subr.mxu0 0.0
        %902 = vmatpush1.msra.mxu0 %v867
        %903 = vmatprep.subr.mxu0 0.0
        %904 = vmatpush1.msra.mxu0 %v868
        %905 = vmatprep.subr.mxu0 0.0
        %906 = vmatpush1.msra.mxu0 %v869
        %907 = vmatprep.subr.mxu0 0.0
        %908 = vmatpush1.msra.mxu0 %v870
        %909 = vmatprep.subr.mxu0 0.0
        %910 = vmatpush1.msra.mxu0 %v871
        %911 = vmatprep.subr.mxu0 0.0
        %912 = vmatpush1.msra.mxu0 0.0
        %913 = vmatprep.subr.mxu0 0.0
        %914 = vmatpush1.msra.mxu0 0.0
        %915 = vmatprep.subr.mxu0 0.0
        %916 = vmatpush1.msra.mxu0 0.0
        %917 = vmatprep.subr.mxu0 0.0
        %918 = vmatpush1.msra.mxu0 0.0
        %919 = vmatprep.subr.mxu0 0.0
        %920 = vmatpush1.msra.mxu0 0.0
        %921 = vmatprep.subr.mxu0 0.0
        %922 = vmatpush1.msra.mxu0 0.0
        %923 = vmatprep.subr.mxu0 0.0
        %924 = vmatpush1.msra.mxu0 0.0
        %925 = vmatprep.subr.mxu0 0.0
        %926 = vmatpush1.msra.mxu0 0.0
        %927 = vmatprep.subr.mxu0 0.0
        %928 = vmatpush1.msra.mxu0 0.0
        %929 = vmatprep.subr.mxu0 0.0
        %930 = vmatpush1.msra.mxu0 0.0
        %931 = vmatprep.subr.mxu0 0.0
        %932 = vmatpush1.msra.mxu0 0.0
        %933 = vmatprep.subr.mxu0 0.0
        %934 = vmatpush1.msra.mxu0 0.0
        %935 = vmatprep.subr.mxu0 0.0
        %936 = vmatpush1.msra.mxu0 0.0
        %937 = vmatprep.subr.mxu0 0.0
        %938 = vmatpush1.msra.mxu0 0.0
        %939 = vmatprep.subr.mxu0 0.0
        %940 = vmatpush1.msra.mxu0 0.0
        %941 = vmatprep.subr.mxu0 0.0
        %942 = vmatpush1.msra.mxu0 0.0
        %943 = vmatprep.mubr.f32.mxu0 0.0
        %944 = vmatmul.mubr.f32.gmra.mrb[0].mxu0 %v824
        %v945 = vpop.f32.mrb[0].mxu0
        %v946 = vadd.f32 %v877, %v945
        %v947 = vpop.f32.mrb[0].mxu0
        %948 = vmatprep.mubr.f32.mxu0 0.0
        %949 = vmatmul.mubr.f32.gmra.mrb[0].mxu0 %v825
        %v950 = vpop.f32.mrb[0].mxu0
        %v951 = vadd.f32 %v877, %v950
        %v952 = vpop.f32.mrb[0].mxu0
        %953 = vmatprep.mubr.f32.mxu0 0.0
        %954 = vmatmul.mubr.f32.gmra.mrb[0].mxu0 %v826
        %v955 = vpop.f32.mrb[0].mxu0
        %v956 = vadd.f32 %v877, %v955
        %v957 = vpop.f32.mrb[0].mxu0
        %958 = vmatprep.mubr.f32.mxu0 0.0
        %959 = vmatmul.mubr.f32.gmra.mrb[0].mxu0 %v827
        %v960 = vpop.f32.mrb[0].mxu0
        %v961 = vadd.f32 %v877, %v960
        %v962 = vpop.f32.mrb[0].mxu0
        %963 = vmatprep.mubr.f32.mxu0 0.0
        %964 = vmatmul.mubr.f32.gmra.mrb[0].mxu0 %v828
        %v965 = vpop.f32.mrb[0].mxu0
        %v966 = vadd.f32 %v877, %v965
        %v967 = vpop.f32.mrb[0].mxu0
        %968 = vmatprep.mubr.f32.mxu0 0.0
        %969 = vmatmul.mubr.f32.gmra.mrb[0].mxu0 %v829
        %v970 = vpop.f32.mrb[0].mxu0
        %v971 = vadd.f32 %v877, %v970
        %v972 = vpop.f32.mrb[0].mxu0
        %973 = vmatprep.mubr.f32.mxu0 0.0
        %974 = vmatmul.mubr.f32.gmra.mrb[0].mxu0 %v830
        %v975 = vpop.f32.mrb[0].mxu0
        %v976 = vadd.f32 %v877, %v975
        %v977 = vpop.f32.mrb[0].mxu0
        %978 = vmatprep.mubr.f32.mxu0 0.0
        %979 = vmatmul.mubr.f32.gmra.mrb[0].mxu0 %v831
        %v980 = vpop.f32.mrb[0].mxu0
        %v981 = vadd.f32 %v877, %v980
        %v982 = vpop.f32.mrb[0].mxu0
        %983 = vmatprep.mubr.f32.mxu0 0.0
        %984 = vmatmul.mubr.f32.gmra.mrb[0].mxu0 %v832
        %v985 = vpop.f32.mrb[0].mxu0
        %v986 = vadd.f32 %v877, %v985
        %v987 = vpop.f32.mrb[0].mxu0
        %988 = vmatprep.mubr.f32.mxu0 0.0
        %989 = vmatmul.mubr.f32.gmra.mrb[0].mxu0 %v833
        %v990 = vpop.f32.mrb[0].mxu0
        %v991 = vadd.f32 %v877, %v990
        %v992 = vpop.f32.mrb[0].mxu0
        %993 = vmatprep.mubr.f32.mxu0 0.0
        %994 = vmatmul.mubr.f32.gmra.mrb[0].mxu0 %v834
        %v995 = vpop.f32.mrb[0].mxu0
        %v996 = vadd.f32 %v877, %v995
        %v997 = vpop.f32.mrb[0].mxu0
        %998 = vmatprep.mubr.f32.mxu0 0.0
        %999 = vmatmul.mubr.f32.gmra.mrb[0].mxu0 %v835
        %v1000 = vpop.f32.mrb[0].mxu0
        %v1001 = vadd.f32 %v877, %v1000
        %v1002 = vpop.f32.mrb[0].mxu0
        %1003 = vmatprep.mubr.f32.mxu0 0.0
        %1004 = vmatmul.mubr.f32.gmra.mrb[0].mxu0 %v836
        %v1005 = vpop.f32.mrb[0].mxu0
        %v1006 = vadd.f32 %v877, %v1005
        %v1007 = vpop.f32.mrb[0].mxu0
        %1008 = vmatprep.mubr.f32.mxu0 0.0
        %1009 = vmatmul.mubr.f32.gmra.mrb[0].mxu0 %v837
        %v1010 = vpop.f32.mrb[0].mxu0
        %v1011 = vadd.f32 %v877, %v1010
        %v1012 = vpop.f32.mrb[0].mxu0
        %1013 = vmatprep.mubr.f32.mxu0 0.0
        %1014 = vmatmul.mubr.f32.gmra.mrb[0].mxu0 %v838
        %v1015 = vpop.f32.mrb[0].mxu0
        %v1016 = vadd.f32 %v877, %v1015
        %v1017 = vpop.f32.mrb[0].mxu0
        %1018 = vmatprep.mubr.f32.mxu0 0.0
        %1019 = vmatmul.mubr.f32.gmra.mrb[0].mxu0 %v839
        %v1020 = vpop.f32.mrb[0].mxu0
        %v1021 = vadd.f32 %v877, %v1020
        %v1022 = vpop.f32.mrb[0].mxu0
        %1023 = vmatprep.mubr.f32.mxu0 0.0
        %1024 = vmatmul.mubr.f32.gmra.mrb[0].mxu0 %v840
        %v1025 = vpop.f32.mrb[0].mxu0
        %v1026 = vadd.f32 %v877, %v1025
        %v1027 = vpop.f32.mrb[0].mxu0
        %1028 = vmatprep.mubr.f32.mxu0 0.0
        %1029 = vmatmul.mubr.f32.gmra.mrb[0].mxu0 %v841
        %v1030 = vpop.f32.mrb[0].mxu0
        %v1031 = vadd.f32 %v877, %v1030
        %v1032 = vpop.f32.mrb[0].mxu0
        %1033 = vmatprep.mubr.f32.mxu0 0.0
        %1034 = vmatmul.mubr.f32.gmra.mrb[0].mxu0 %v842
        %v1035 = vpop.f32.mrb[0].mxu0
        %v1036 = vadd.f32 %v877, %v1035
        %v1037 = vpop.f32.mrb[0].mxu0
        %1038 = vmatprep.mubr.f32.mxu0 0.0
        %1039 = vmatmul.mubr.f32.gmra.mrb[0].mxu0 %v843
        %v1040 = vpop.f32.mrb[0].mxu0
        %v1041 = vadd.f32 %v877, %v1040
        %v1042 = vpop.f32.mrb[0].mxu0
        %1043 = vmatprep.mubr.f32.mxu0 0.0
        %1044 = vmatmul.mubr.f32.gmra.mrb[0].mxu0 %v844
        %v1045 = vpop.f32.mrb[0].mxu0
        %v1046 = vadd.f32 %v877, %v1045
        %v1047 = vpop.f32.mrb[0].mxu0
        %1048 = vmatprep.mubr.f32.mxu0 0.0
        %1049 = vmatmul.mubr.f32.gmra.mrb[0].mxu0 %v845
        %v1050 = vpop.f32.mrb[0].mxu0
        %v1051 = vadd.f32 %v877, %v1050
        %v1052 = vpop.f32.mrb[0].mxu0
        %1053 = vmatprep.mubr.f32.mxu0 0.0
        %1054 = vmatmul.mubr.f32.gmra.mrb[0].mxu0 %v846
        %v1055 = vpop.f32.mrb[0].mxu0
        %v1056 = vadd.f32 %v877, %v1055
        %v1057 = vpop.f32.mrb[0].mxu0
        %1058 = vmatprep.mubr.f32.mxu0 0.0
        %1059 = vmatmul.mubr.f32.gmra.mrb[0].mxu0 %v847
        %v1060 = vpop.f32.mrb[0].mxu0
        %v1061 = vadd.f32 %v877, %v1060
        %v1062 = vpop.f32.mrb[0].mxu0
        %1063 = vmatprep.mubr.f32.mxu0 0.0
        %1064 = vmatmul.mubr.f32.gmra.mrb[0].mxu0 %v848
        %v1065 = vpop.f32.mrb[0].mxu0
        %v1066 = vadd.f32 %v877, %v1065
        %v1067 = vpop.f32.mrb[0].mxu0
        %1068 = vmatprep.mubr.f32.mxu0 0.0
        %1069 = vmatmul.mubr.f32.gmra.mrb[0].mxu0 %v849
        %v1070 = vpop.f32.mrb[0].mxu0
        %v1071 = vadd.f32 %v877, %v1070
        %v1072 = vpop.f32.mrb[0].mxu0
        %1073 = vmatprep.mubr.f32.mxu0 0.0
        %1074 = vmatmul.mubr.f32.gmra.mrb[0].mxu0 %v850
        %v1075 = vpop.f32.mrb[0].mxu0
        %v1076 = vadd.f32 %v877, %v1075
        %v1077 = vpop.f32.mrb[0].mxu0
        %1078 = vmatprep.mubr.f32.mxu0 0.0
        %1079 = vmatmul.mubr.f32.gmra.mrb[0].mxu0 %v851
        %v1080 = vpop.f32.mrb[0].mxu0
        %v1081 = vadd.f32 %v877, %v1080
        %v1082 = vpop.f32.mrb[0].mxu0
        %1083 = vmatprep.mubr.f32.mxu0 0.0
        %1084 = vmatmul.mubr.f32.gmra.mrb[0].mxu0 %v852
        %v1085 = vpop.f32.mrb[0].mxu0
        %v1086 = vadd.f32 %v877, %v1085
        %v1087 = vpop.f32.mrb[0].mxu0
        %1088 = vmatprep.mubr.f32.mxu0 0.0
        %1089 = vmatmul.mubr.f32.gmra.mrb[0].mxu0 %v853
        %v1090 = vpop.f32.mrb[0].mxu0
        %v1091 = vadd.f32 %v877, %v1090
        %v1092 = vpop.f32.mrb[0].mxu0
        %1093 = vmatprep.mubr.f32.mxu0 0.0
        %1094 = vmatmul.mubr.f32.gmra.mrb[0].mxu0 %v854
        %v1095 = vpop.f32.mrb[0].mxu0
        %v1096 = vadd.f32 %v877, %v1095
        %v1097 = vpop.f32.mrb[0].mxu0
        %1098 = vmatprep.mubr.f32.mxu0 0.0
        %1099 = vmatmul.mubr.f32.gmra.mrb[0].mxu0 %v855
        %v1100 = vpop.f32.mrb[0].mxu0
        %v1101 = vadd.f32 %v877, %v1100
        %v1102 = vpop.f32.mrb[0].mxu0
        %1103 = vdwg.mxu0
        %vm1104 = vcmp.gt.f32.partialorder %v946, 0.0
        %vm1105 = vcmp.gt.f32.partialorder %v951, 0.0
        %vm1106 = vcmp.gt.f32.partialorder %v956, 0.0
        %vm1107 = vcmp.gt.f32.partialorder %v961, 0.0
        %vm1108 = vcmp.gt.f32.partialorder %v966, 0.0
        %vm1109 = vcmp.gt.f32.partialorder %v971, 0.0
        %vm1110 = vcmp.gt.f32.partialorder %v976, 0.0
        %vm1111 = vcmp.gt.f32.partialorder %v981, 0.0
        %vm1112 = vcmp.gt.f32.partialorder %v986, 0.0
        %vm1113 = vcmp.gt.f32.partialorder %v991, 0.0
        %vm1114 = vcmp.gt.f32.partialorder %v996, 0.0
        %vm1115 = vcmp.gt.f32.partialorder %v1001, 0.0
        %vm1116 = vcmp.gt.f32.partialorder %v1006, 0.0
        %vm1117 = vcmp.gt.f32.partialorder %v1011, 0.0
        %vm1118 = vcmp.gt.f32.partialorder %v1016, 0.0
        %vm1119 = vcmp.gt.f32.partialorder %v1021, 0.0
        %vm1120 = vcmp.gt.f32.partialorder %v1026, 0.0
        %vm1121 = vcmp.gt.f32.partialorder %v1031, 0.0
        %vm1122 = vcmp.gt.f32.partialorder %v1036, 0.0
        %vm1123 = vcmp.gt.f32.partialorder %v1041, 0.0
        %vm1124 = vcmp.gt.f32.partialorder %v1046, 0.0
        %vm1125 = vcmp.gt.f32.partialorder %v1051, 0.0
        %vm1126 = vcmp.gt.f32.partialorder %v1056, 0.0
        %vm1127 = vcmp.gt.f32.partialorder %v1061, 0.0
        %vm1128 = vcmp.gt.f32.partialorder %v1066, 0.0
        %vm1129 = vcmp.gt.f32.partialorder %v1071, 0.0
        %vm1130 = vcmp.gt.f32.partialorder %v1076, 0.0
        %vm1131 = vcmp.gt.f32.partialorder %v1081, 0.0
        %vm1132 = vcmp.gt.f32.partialorder %v1086, 0.0
        %vm1133 = vcmp.gt.f32.partialorder %v1091, 0.0
        %vm1134 = vcmp.gt.f32.partialorder %v1096, 0.0
        %vm1135 = vcmp.gt.f32.partialorder %v1101, 0.0
        %v1136 = vmul.f32 %v946, 0.01
        %v1137 = vmul.f32 %v951, 0.01
        %v1138 = vmul.f32 %v956, 0.01
        %v1139 = vmul.f32 %v961, 0.01
        %v1140 = vmul.f32 %v966, 0.01
        %v1141 = vmul.f32 %v971, 0.01
        %v1142 = vmul.f32 %v976, 0.01
        %v1143 = vmul.f32 %v981, 0.01
        %v1144 = vmul.f32 %v986, 0.01
        %v1145 = vmul.f32 %v991, 0.01
        %v1146 = vmul.f32 %v996, 0.01
        %v1147 = vmul.f32 %v1001, 0.01
        %v1148 = vmul.f32 %v1006, 0.01
        %v1149 = vmul.f32 %v1011, 0.01
        %v1150 = vmul.f32 %v1016, 0.01
        %v1151 = vmul.f32 %v1021, 0.01
        %v1152 = vmul.f32 %v1026, 0.01
        %v1153 = vmul.f32 %v1031, 0.01
        %v1154 = vmul.f32 %v1036, 0.01
        %v1155 = vmul.f32 %v1041, 0.01
        %v1156 = vmul.f32 %v1046, 0.01
        %v1157 = vmul.f32 %v1051, 0.01
        %v1158 = vmul.f32 %v1056, 0.01
        %v1159 = vmul.f32 %v1061, 0.01
        %v1160 = vmul.f32 %v1066, 0.01
        %v1161 = vmul.f32 %v1071, 0.01
        %v1162 = vmul.f32 %v1076, 0.01
        %v1163 = vmul.f32 %v1081, 0.01
        %v1164 = vmul.f32 %v1086, 0.01
        %v1165 = vmul.f32 %v1091, 0.01
        %v1166 = vmul.f32 %v1096, 0.01
        %v1167 = vmul.f32 %v1101, 0.01
        %v1168 = vsel %vm1104, %v946, %v1136
        %v1169 = vsel %vm1105, %v951, %v1137
        %v1170 = vsel %vm1106, %v956, %v1138
        %v1171 = vsel %vm1107, %v961, %v1139
        %v1172 = vsel %vm1108, %v966, %v1140
        %v1173 = vsel %vm1109, %v971, %v1141
        %v1174 = vsel %vm1110, %v976, %v1142
        %v1175 = vsel %vm1111, %v981, %v1143
        %v1176 = vsel %vm1112, %v986, %v1144
        %v1177 = vsel %vm1113, %v991, %v1145
        %v1178 = vsel %vm1114, %v996, %v1146
        %v1179 = vsel %vm1115, %v1001, %v1147
        %v1180 = vsel %vm1116, %v1006, %v1148
        %v1181 = vsel %vm1117, %v1011, %v1149
        %v1182 = vsel %vm1118, %v1016, %v1150
        %v1183 = vsel %vm1119, %v1021, %v1151
        %v1184 = vsel %vm1120, %v1026, %v1152
        %v1185 = vsel %vm1121, %v1031, %v1153
        %v1186 = vsel %vm1122, %v1036, %v1154
        %v1187 = vsel %vm1123, %v1041, %v1155
        %v1188 = vsel %vm1124, %v1046, %v1156
        %v1189 = vsel %vm1125, %v1051, %v1157
        %v1190 = vsel %vm1126, %v1056, %v1158
        %v1191 = vsel %vm1127, %v1061, %v1159
        %v1192 = vsel %vm1128, %v1066, %v1160
        %v1193 = vsel %vm1129, %v1071, %v1161
        %v1194 = vsel %vm1130, %v1076, %v1162
        %v1195 = vsel %vm1131, %v1081, %v1163
        %v1196 = vsel %vm1132, %v1086, %v1164
        %v1197 = vsel %vm1133, %v1091, %v1165
        %v1198 = vsel %vm1134, %v1096, %v1166
        %v1199 = vsel %vm1135, %v1101, %v1167
        %v1200 = vld [vmem:[#allocation8] sm:$0xff]
        %v1201 = vld [vmem:[#allocation8 + $0x8] sm:$0xff]
        %v1202 = vld [vmem:[#allocation8 + $0x10] sm:$0xff]
        %v1203 = vld [vmem:[#allocation8 + $0x18] sm:$0xff]
        %v1204 = vld [vmem:[#allocation8 + $0x20] sm:$0xff]
        %v1205 = vld [vmem:[#allocation8 + $0x28] sm:$0xff]
        %v1206 = vld [vmem:[#allocation8 + $0x30] sm:$0xff]
        %v1207 = vld [vmem:[#allocation8 + $0x38] sm:$0xff]
        %v1208 = vld [vmem:[#allocation8 + $0x40] sm:$0xff]
        %v1209 = vld [vmem:[#allocation8 + $0x48] sm:$0xff]
        %v1210 = vld [vmem:[#allocation8 + $0x50] sm:$0xff]
        %v1211 = vld [vmem:[#allocation8 + $0x58] sm:$0xff]
        %v1212 = vld [vmem:[#allocation8 + $0x60] sm:$0xff]
        %v1213 = vld [vmem:[#allocation8 + $0x68] sm:$0xff]
        %v1214 = vld [vmem:[#allocation8 + $0x70] sm:$0xff]
        %v1215 = vld [vmem:[#allocation8 + $0x78] sm:$0xff]
        %v1216 = vld [vmem:[%s6] sm:$0x1]
        %v1218 = vlaneseq
        %v1219 = vshrl.u32 %v1218, 7
        %v1220 = vsub.s32 0, %v1219
        %v1221 = vrot.slane %v1216, %v1220
        %1223 = vmatprep.subr.mxu0 0.0
        %1224 = vmatpush1.msra.mxu0 %v1200
        %1225 = vmatprep.subr.mxu0 0.0
        %1226 = vmatpush1.msra.mxu0 %v1201
        %1227 = vmatprep.subr.mxu0 0.0
        %1228 = vmatpush1.msra.mxu0 %v1202
        %1229 = vmatprep.subr.mxu0 0.0
        %1230 = vmatpush1.msra.mxu0 %v1203
        %1231 = vmatprep.subr.mxu0 0.0
        %1232 = vmatpush1.msra.mxu0 %v1204
        %1233 = vmatprep.subr.mxu0 0.0
        %1234 = vmatpush1.msra.mxu0 %v1205
        %1235 = vmatprep.subr.mxu0 0.0
        %1236 = vmatpush1.msra.mxu0 %v1206
        %1237 = vmatprep.subr.mxu0 0.0
        %1238 = vmatpush1.msra.mxu0 %v1207
        %1239 = vmatprep.subr.mxu0 0.0
        %1240 = vmatpush1.msra.mxu0 %v1208
        %1241 = vmatprep.subr.mxu0 0.0
        %1242 = vmatpush1.msra.mxu0 %v1209
        %1243 = vmatprep.subr.mxu0 0.0
        %1244 = vmatpush1.msra.mxu0 %v1210
        %1245 = vmatprep.subr.mxu0 0.0
        %1246 = vmatpush1.msra.mxu0 %v1211
        %1247 = vmatprep.subr.mxu0 0.0
        %1248 = vmatpush1.msra.mxu0 %v1212
        %1249 = vmatprep.subr.mxu0 0.0
        %1250 = vmatpush1.msra.mxu0 %v1213
        %1251 = vmatprep.subr.mxu0 0.0
        %1252 = vmatpush1.msra.mxu0 %v1214
        %1253 = vmatprep.subr.mxu0 0.0
        %1254 = vmatpush1.msra.mxu0 %v1215
        %1255 = vmatprep.subr.mxu0 0.0
        %1256 = vmatpush1.msra.mxu0 0.0
        %1257 = vmatprep.subr.mxu0 0.0
        %1258 = vmatpush1.msra.mxu0 0.0
        %1259 = vmatprep.subr.mxu0 0.0
        %1260 = vmatpush1.msra.mxu0 0.0
        %1261 = vmatprep.subr.mxu0 0.0
        %1262 = vmatpush1.msra.mxu0 0.0
        %1263 = vmatprep.subr.mxu0 0.0
        %1264 = vmatpush1.msra.mxu0 0.0
        %1265 = vmatprep.subr.mxu0 0.0
        %1266 = vmatpush1.msra.mxu0 0.0
        %1267 = vmatprep.subr.mxu0 0.0
        %1268 = vmatpush1.msra.mxu0 0.0
        %1269 = vmatprep.subr.mxu0 0.0
        %1270 = vmatpush1.msra.mxu0 0.0
        %1271 = vmatprep.subr.mxu0 0.0
        %1272 = vmatpush1.msra.mxu0 0.0
        %1273 = vmatprep.subr.mxu0 0.0
        %1274 = vmatpush1.msra.mxu0 0.0
        %1275 = vmatprep.subr.mxu0 0.0
        %1276 = vmatpush1.msra.mxu0 0.0
        %1277 = vmatprep.subr.mxu0 0.0
        %1278 = vmatpush1.msra.mxu0 0.0
        %1279 = vmatprep.subr.mxu0 0.0
        %1280 = vmatpush1.msra.mxu0 0.0
        %1281 = vmatprep.subr.mxu0 0.0
        %1282 = vmatpush1.msra.mxu0 0.0
        %1283 = vmatprep.subr.mxu0 0.0
        %1284 = vmatpush1.msra.mxu0 0.0
        %1285 = vmatprep.subr.mxu0 0.0
        %1286 = vmatpush1.msra.mxu0 0.0
        %1287 = vmatprep.mubr.f32.mxu0 0.0
        %1288 = vmatmul.mubr.f32.gmra.mrb[0].mxu0 %v1168
        %v1289 = vpop.f32.mrb[0].mxu0
        %v1290 = vadd.f32 %v1221, %v1289
        %v1291 = vpop.f32.mrb[0].mxu0
        %1292 = vmatprep.mubr.f32.mxu0 0.0
        %1293 = vmatmul.mubr.f32.gmra.mrb[0].mxu0 %v1169
        %v1294 = vpop.f32.mrb[0].mxu0
        %v1295 = vadd.f32 %v1221, %v1294
        %v1296 = vpop.f32.mrb[0].mxu0
        %1297 = vmatprep.mubr.f32.mxu0 0.0
        %1298 = vmatmul.mubr.f32.gmra.mrb[0].mxu0 %v1170
        %v1299 = vpop.f32.mrb[0].mxu0
        %v1300 = vadd.f32 %v1221, %v1299
        %v1301 = vpop.f32.mrb[0].mxu0
        %1302 = vmatprep.mubr.f32.mxu0 0.0
        %1303 = vmatmul.mubr.f32.gmra.mrb[0].mxu0 %v1171
        %v1304 = vpop.f32.mrb[0].mxu0
        %v1305 = vadd.f32 %v1221, %v1304
        %v1306 = vpop.f32.mrb[0].mxu0
        %1307 = vmatprep.mubr.f32.mxu0 0.0
        %1308 = vmatmul.mubr.f32.gmra.mrb[0].mxu0 %v1172
        %v1309 = vpop.f32.mrb[0].mxu0
        %v1310 = vadd.f32 %v1221, %v1309
        %v1311 = vpop.f32.mrb[0].mxu0
        %1312 = vmatprep.mubr.f32.mxu0 0.0
        %1313 = vmatmul.mubr.f32.gmra.mrb[0].mxu0 %v1173
        %v1314 = vpop.f32.mrb[0].mxu0
        %v1315 = vadd.f32 %v1221, %v1314
        %v1316 = vpop.f32.mrb[0].mxu0
        %1317 = vmatprep.mubr.f32.mxu0 0.0
        %1318 = vmatmul.mubr.f32.gmra.mrb[0].mxu0 %v1174
        %v1319 = vpop.f32.mrb[0].mxu0
        %v1320 = vadd.f32 %v1221, %v1319
        %v1321 = vpop.f32.mrb[0].mxu0
        %1322 = vmatprep.mubr.f32.mxu0 0.0
        %1323 = vmatmul.mubr.f32.gmra.mrb[0].mxu0 %v1175
        %v1324 = vpop.f32.mrb[0].mxu0
        %v1325 = vadd.f32 %v1221, %v1324
        %v1326 = vpop.f32.mrb[0].mxu0
        %1327 = vmatprep.mubr.f32.mxu0 0.0
        %1328 = vmatmul.mubr.f32.gmra.mrb[0].mxu0 %v1176
        %v1329 = vpop.f32.mrb[0].mxu0
        %v1330 = vadd.f32 %v1221, %v1329
        %v1331 = vpop.f32.mrb[0].mxu0
        %1332 = vmatprep.mubr.f32.mxu0 0.0
        %1333 = vmatmul.mubr.f32.gmra.mrb[0].mxu0 %v1177
        %v1334 = vpop.f32.mrb[0].mxu0
        %v1335 = vadd.f32 %v1221, %v1334
        %v1336 = vpop.f32.mrb[0].mxu0
        %1337 = vmatprep.mubr.f32.mxu0 0.0
        %1338 = vmatmul.mubr.f32.gmra.mrb[0].mxu0 %v1178
        %v1339 = vpop.f32.mrb[0].mxu0
        %v1340 = vadd.f32 %v1221, %v1339
        %v1341 = vpop.f32.mrb[0].mxu0
        %1342 = vmatprep.mubr.f32.mxu0 0.0
        %1343 = vmatmul.mubr.f32.gmra.mrb[0].mxu0 %v1179
        %v1344 = vpop.f32.mrb[0].mxu0
        %v1345 = vadd.f32 %v1221, %v1344
        %v1346 = vpop.f32.mrb[0].mxu0
        %1347 = vmatprep.mubr.f32.mxu0 0.0
        %1348 = vmatmul.mubr.f32.gmra.mrb[0].mxu0 %v1180
        %v1349 = vpop.f32.mrb[0].mxu0
        %v1350 = vadd.f32 %v1221, %v1349
        %v1351 = vpop.f32.mrb[0].mxu0
        %1352 = vmatprep.mubr.f32.mxu0 0.0
        %1353 = vmatmul.mubr.f32.gmra.mrb[0].mxu0 %v1181
        %v1354 = vpop.f32.mrb[0].mxu0
        %v1355 = vadd.f32 %v1221, %v1354
        %v1356 = vpop.f32.mrb[0].mxu0
        %1357 = vmatprep.mubr.f32.mxu0 0.0
        %1358 = vmatmul.mubr.f32.gmra.mrb[0].mxu0 %v1182
        %v1359 = vpop.f32.mrb[0].mxu0
        %v1360 = vadd.f32 %v1221, %v1359
        %v1361 = vpop.f32.mrb[0].mxu0
        %1362 = vmatprep.mubr.f32.mxu0 0.0
        %1363 = vmatmul.mubr.f32.gmra.mrb[0].mxu0 %v1183
        %v1364 = vpop.f32.mrb[0].mxu0
        %v1365 = vadd.f32 %v1221, %v1364
        %v1366 = vpop.f32.mrb[0].mxu0
        %1367 = vmatprep.mubr.f32.mxu0 0.0
        %1368 = vmatmul.mubr.f32.gmra.mrb[0].mxu0 %v1184
        %v1369 = vpop.f32.mrb[0].mxu0
        %v1370 = vadd.f32 %v1221, %v1369
        %v1371 = vpop.f32.mrb[0].mxu0
        %1372 = vmatprep.mubr.f32.mxu0 0.0
        %1373 = vmatmul.mubr.f32.gmra.mrb[0].mxu0 %v1185
        %v1374 = vpop.f32.mrb[0].mxu0
        %v1375 = vadd.f32 %v1221, %v1374
        %v1376 = vpop.f32.mrb[0].mxu0
        %1377 = vmatprep.mubr.f32.mxu0 0.0
        %1378 = vmatmul.mubr.f32.gmra.mrb[0].mxu0 %v1186
        %v1379 = vpop.f32.mrb[0].mxu0
        %v1380 = vadd.f32 %v1221, %v1379
        %v1381 = vpop.f32.mrb[0].mxu0
        %1382 = vmatprep.mubr.f32.mxu0 0.0
        %1383 = vmatmul.mubr.f32.gmra.mrb[0].mxu0 %v1187
        %v1384 = vpop.f32.mrb[0].mxu0
        %v1385 = vadd.f32 %v1221, %v1384
        %v1386 = vpop.f32.mrb[0].mxu0
        %1387 = vmatprep.mubr.f32.mxu0 0.0
        %1388 = vmatmul.mubr.f32.gmra.mrb[0].mxu0 %v1188
        %v1389 = vpop.f32.mrb[0].mxu0
        %v1390 = vadd.f32 %v1221, %v1389
        %v1391 = vpop.f32.mrb[0].mxu0
        %1392 = vmatprep.mubr.f32.mxu0 0.0
        %1393 = vmatmul.mubr.f32.gmra.mrb[0].mxu0 %v1189
        %v1394 = vpop.f32.mrb[0].mxu0
        %v1395 = vadd.f32 %v1221, %v1394
        %v1396 = vpop.f32.mrb[0].mxu0
        %1397 = vmatprep.mubr.f32.mxu0 0.0
        %1398 = vmatmul.mubr.f32.gmra.mrb[0].mxu0 %v1190
        %v1399 = vpop.f32.mrb[0].mxu0
        %v1400 = vadd.f32 %v1221, %v1399
        %v1401 = vpop.f32.mrb[0].mxu0
        %1402 = vmatprep.mubr.f32.mxu0 0.0
        %1403 = vmatmul.mubr.f32.gmra.mrb[0].mxu0 %v1191
        %v1404 = vpop.f32.mrb[0].mxu0
        %v1405 = vadd.f32 %v1221, %v1404
        %v1406 = vpop.f32.mrb[0].mxu0
        %1407 = vmatprep.mubr.f32.mxu0 0.0
        %1408 = vmatmul.mubr.f32.gmra.mrb[0].mxu0 %v1192
        %v1409 = vpop.f32.mrb[0].mxu0
        %v1410 = vadd.f32 %v1221, %v1409
        %v1411 = vpop.f32.mrb[0].mxu0
        %1412 = vmatprep.mubr.f32.mxu0 0.0
        %1413 = vmatmul.mubr.f32.gmra.mrb[0].mxu0 %v1193
        %v1414 = vpop.f32.mrb[0].mxu0
        %v1415 = vadd.f32 %v1221, %v1414
        %v1416 = vpop.f32.mrb[0].mxu0
        %1417 = vmatprep.mubr.f32.mxu0 0.0
        %1418 = vmatmul.mubr.f32.gmra.mrb[0].mxu0 %v1194
        %v1419 = vpop.f32.mrb[0].mxu0
        %v1420 = vadd.f32 %v1221, %v1419
        %v1421 = vpop.f32.mrb[0].mxu0
        %1422 = vmatprep.mubr.f32.mxu0 0.0
        %1423 = vmatmul.mubr.f32.gmra.mrb[0].mxu0 %v1195
        %v1424 = vpop.f32.mrb[0].mxu0
        %v1425 = vadd.f32 %v1221, %v1424
        %v1426 = vpop.f32.mrb[0].mxu0
        %1427 = vmatprep.mubr.f32.mxu0 0.0
        %1428 = vmatmul.mubr.f32.gmra.mrb[0].mxu0 %v1196
        %v1429 = vpop.f32.mrb[0].mxu0
        %v1430 = vadd.f32 %v1221, %v1429
        %v1431 = vpop.f32.mrb[0].mxu0
        %1432 = vmatprep.mubr.f32.mxu0 0.0
        %1433 = vmatmul.mubr.f32.gmra.mrb[0].mxu0 %v1197
        %v1434 = vpop.f32.mrb[0].mxu0
        %v1435 = vadd.f32 %v1221, %v1434
        %v1436 = vpop.f32.mrb[0].mxu0
        %1437 = vmatprep.mubr.f32.mxu0 0.0
        %1438 = vmatmul.mubr.f32.gmra.mrb[0].mxu0 %v1198
        %v1439 = vpop.f32.mrb[0].mxu0
        %v1440 = vadd.f32 %v1221, %v1439
        %v1441 = vpop.f32.mrb[0].mxu0
        %1442 = vmatprep.mubr.f32.mxu0 0.0
        %1443 = vmatmul.mubr.f32.gmra.mrb[0].mxu0 %v1199
        %v1444 = vpop.f32.mrb[0].mxu0
        %v1445 = vadd.f32 %v1221, %v1444
        %v1446 = vpop.f32.mrb[0].mxu0
        %1447 = vdwg.mxu0
        %vm1448 = vcmp.gt.f32.partialorder %v1290, 0.0
        %vm1449 = vcmp.gt.f32.partialorder %v1295, 0.0
        %vm1450 = vcmp.gt.f32.partialorder %v1300, 0.0
        %vm1451 = vcmp.gt.f32.partialorder %v1305, 0.0
        %vm1452 = vcmp.gt.f32.partialorder %v1310, 0.0
        %vm1453 = vcmp.gt.f32.partialorder %v1315, 0.0
        %vm1454 = vcmp.gt.f32.partialorder %v1320, 0.0
        %vm1455 = vcmp.gt.f32.partialorder %v1325, 0.0
        %vm1456 = vcmp.gt.f32.partialorder %v1330, 0.0
        %vm1457 = vcmp.gt.f32.partialorder %v1335, 0.0
        %vm1458 = vcmp.gt.f32.partialorder %v1340, 0.0
        %vm1459 = vcmp.gt.f32.partialorder %v1345, 0.0
        %vm1460 = vcmp.gt.f32.partialorder %v1350, 0.0
        %vm1461 = vcmp.gt.f32.partialorder %v1355, 0.0
        %vm1462 = vcmp.gt.f32.partialorder %v1360, 0.0
        %vm1463 = vcmp.gt.f32.partialorder %v1365, 0.0
        %vm1464 = vcmp.gt.f32.partialorder %v1370, 0.0
        %vm1465 = vcmp.gt.f32.partialorder %v1375, 0.0
        %vm1466 = vcmp.gt.f32.partialorder %v1380, 0.0
        %vm1467 = vcmp.gt.f32.partialorder %v1385, 0.0
        %vm1468 = vcmp.gt.f32.partialorder %v1390, 0.0
        %vm1469 = vcmp.gt.f32.partialorder %v1395, 0.0
        %vm1470 = vcmp.gt.f32.partialorder %v1400, 0.0
        %vm1471 = vcmp.gt.f32.partialorder %v1405, 0.0
        %vm1472 = vcmp.gt.f32.partialorder %v1410, 0.0
        %vm1473 = vcmp.gt.f32.partialorder %v1415, 0.0
        %vm1474 = vcmp.gt.f32.partialorder %v1420, 0.0
        %vm1475 = vcmp.gt.f32.partialorder %v1425, 0.0
        %vm1476 = vcmp.gt.f32.partialorder %v1430, 0.0
        %vm1477 = vcmp.gt.f32.partialorder %v1435, 0.0
        %vm1478 = vcmp.gt.f32.partialorder %v1440, 0.0
        %vm1479 = vcmp.gt.f32.partialorder %v1445, 0.0
        %v1480 = vmul.f32 %v1290, 0.01
        %v1481 = vmul.f32 %v1295, 0.01
        %v1482 = vmul.f32 %v1300, 0.01
        %v1483 = vmul.f32 %v1305, 0.01
        %v1484 = vmul.f32 %v1310, 0.01
        %v1485 = vmul.f32 %v1315, 0.01
        %v1486 = vmul.f32 %v1320, 0.01
        %v1487 = vmul.f32 %v1325, 0.01
        %v1488 = vmul.f32 %v1330, 0.01
        %v1489 = vmul.f32 %v1335, 0.01
        %v1490 = vmul.f32 %v1340, 0.01
        %v1491 = vmul.f32 %v1345, 0.01
        %v1492 = vmul.f32 %v1350, 0.01
        %v1493 = vmul.f32 %v1355, 0.01
        %v1494 = vmul.f32 %v1360, 0.01
        %v1495 = vmul.f32 %v1365, 0.01
        %v1496 = vmul.f32 %v1370, 0.01
        %v1497 = vmul.f32 %v1375, 0.01
        %v1498 = vmul.f32 %v1380, 0.01
        %v1499 = vmul.f32 %v1385, 0.01
        %v1500 = vmul.f32 %v1390, 0.01
        %v1501 = vmul.f32 %v1395, 0.01
        %v1502 = vmul.f32 %v1400, 0.01
        %v1503 = vmul.f32 %v1405, 0.01
        %v1504 = vmul.f32 %v1410, 0.01
        %v1505 = vmul.f32 %v1415, 0.01
        %v1506 = vmul.f32 %v1420, 0.01
        %v1507 = vmul.f32 %v1425, 0.01
        %v1508 = vmul.f32 %v1430, 0.01
        %v1509 = vmul.f32 %v1435, 0.01
        %v1510 = vmul.f32 %v1440, 0.01
        %v1511 = vmul.f32 %v1445, 0.01
        %v1512 = vsel %vm1448, %v1290, %v1480
        %v1513 = vsel %vm1449, %v1295, %v1481
        %v1514 = vsel %vm1450, %v1300, %v1482
        %v1515 = vsel %vm1451, %v1305, %v1483
        %v1516 = vsel %vm1452, %v1310, %v1484
        %v1517 = vsel %vm1453, %v1315, %v1485
        %v1518 = vsel %vm1454, %v1320, %v1486
        %v1519 = vsel %vm1455, %v1325, %v1487
        %v1520 = vsel %vm1456, %v1330, %v1488
        %v1521 = vsel %vm1457, %v1335, %v1489
        %v1522 = vsel %vm1458, %v1340, %v1490
        %v1523 = vsel %vm1459, %v1345, %v1491
        %v1524 = vsel %vm1460, %v1350, %v1492
        %v1525 = vsel %vm1461, %v1355, %v1493
        %v1526 = vsel %vm1462, %v1360, %v1494
        %v1527 = vsel %vm1463, %v1365, %v1495
        %v1528 = vsel %vm1464, %v1370, %v1496
        %v1529 = vsel %vm1465, %v1375, %v1497
        %v1530 = vsel %vm1466, %v1380, %v1498
        %v1531 = vsel %vm1467, %v1385, %v1499
        %v1532 = vsel %vm1468, %v1390, %v1500
        %v1533 = vsel %vm1469, %v1395, %v1501
        %v1534 = vsel %vm1470, %v1400, %v1502
        %v1535 = vsel %vm1471, %v1405, %v1503
        %v1536 = vsel %vm1472, %v1410, %v1504
        %v1537 = vsel %vm1473, %v1415, %v1505
        %v1538 = vsel %vm1474, %v1420, %v1506
        %v1539 = vsel %vm1475, %v1425, %v1507
        %v1540 = vsel %vm1476, %v1430, %v1508
        %v1541 = vsel %vm1477, %v1435, %v1509
        %v1542 = vsel %vm1478, %v1440, %v1510
        %v1543 = vsel %vm1479, %v1445, %v1511
        %v1544 = vld [vmem:[#allocation10] sm:$0xff]
        %v1545 = vld [vmem:[#allocation10 + $0x8] sm:$0xff]
        %v1546 = vld [vmem:[#allocation10 + $0x10] sm:$0xff]
        %v1547 = vld [vmem:[#allocation10 + $0x18] sm:$0xff]
        %v1548 = vld [vmem:[#allocation10 + $0x20] sm:$0xff]
        %v1549 = vld [vmem:[#allocation10 + $0x28] sm:$0xff]
        %v1550 = vld [vmem:[#allocation10 + $0x30] sm:$0xff]
        %v1551 = vld [vmem:[#allocation10 + $0x38] sm:$0xff]
        %v1552 = vld [vmem:[#allocation10 + $0x40] sm:$0xff]
        %v1553 = vld [vmem:[#allocation10 + $0x48] sm:$0xff]
        %v1554 = vld [vmem:[#allocation10 + $0x50] sm:$0xff]
        %v1555 = vld [vmem:[#allocation10 + $0x58] sm:$0xff]
        %v1556 = vld [vmem:[#allocation10 + $0x60] sm:$0xff]
        %v1557 = vld [vmem:[#allocation10 + $0x68] sm:$0xff]
        %v1558 = vld [vmem:[#allocation10 + $0x70] sm:$0xff]
        %v1559 = vld [vmem:[#allocation10 + $0x78] sm:$0xff]
        %v1560 = vld [vmem:[%s8] sm:$0x1]
        %v1562 = vlaneseq
        %v1563 = vshrl.u32 %v1562, 7
        %v1564 = vsub.s32 0, %v1563
        %v1565 = vrot.slane %v1560, %v1564
        %1567 = vmatprep.subr.mxu0 0.0
        %1568 = vmatpush1.msra.mxu0 %v1544
        %1569 = vmatprep.subr.mxu0 0.0
        %1570 = vmatpush1.msra.mxu0 %v1545
        %1571 = vmatprep.subr.mxu0 0.0
        %1572 = vmatpush1.msra.mxu0 %v1546
        %1573 = vmatprep.subr.mxu0 0.0
        %1574 = vmatpush1.msra.mxu0 %v1547
        %1575 = vmatprep.subr.mxu0 0.0
        %1576 = vmatpush1.msra.mxu0 %v1548
        %1577 = vmatprep.subr.mxu0 0.0
        %1578 = vmatpush1.msra.mxu0 %v1549
        %1579 = vmatprep.subr.mxu0 0.0
        %1580 = vmatpush1.msra.mxu0 %v1550
        %1581 = vmatprep.subr.mxu0 0.0
        %1582 = vmatpush1.msra.mxu0 %v1551
        %1583 = vmatprep.subr.mxu0 0.0
        %1584 = vmatpush1.msra.mxu0 %v1552
        %1585 = vmatprep.subr.mxu0 0.0
        %1586 = vmatpush1.msra.mxu0 %v1553
        %1587 = vmatprep.subr.mxu0 0.0
        %1588 = vmatpush1.msra.mxu0 %v1554
        %1589 = vmatprep.subr.mxu0 0.0
        %1590 = vmatpush1.msra.mxu0 %v1555
        %1591 = vmatprep.subr.mxu0 0.0
        %1592 = vmatpush1.msra.mxu0 %v1556
        %1593 = vmatprep.subr.mxu0 0.0
        %1594 = vmatpush1.msra.mxu0 %v1557
        %1595 = vmatprep.subr.mxu0 0.0
        %1596 = vmatpush1.msra.mxu0 %v1558
        %1597 = vmatprep.subr.mxu0 0.0
        %1598 = vmatpush1.msra.mxu0 %v1559
        %1599 = vmatprep.subr.mxu0 0.0
        %1600 = vmatpush1.msra.mxu0 0.0
        %1601 = vmatprep.subr.mxu0 0.0
        %1602 = vmatpush1.msra.mxu0 0.0
        %1603 = vmatprep.subr.mxu0 0.0
        %1604 = vmatpush1.msra.mxu0 0.0
        %1605 = vmatprep.subr.mxu0 0.0
        %1606 = vmatpush1.msra.mxu0 0.0
        %1607 = vmatprep.subr.mxu0 0.0
        %1608 = vmatpush1.msra.mxu0 0.0
        %1609 = vmatprep.subr.mxu0 0.0
        %1610 = vmatpush1.msra.mxu0 0.0
        %1611 = vmatprep.subr.mxu0 0.0
        %1612 = vmatpush1.msra.mxu0 0.0
        %1613 = vmatprep.subr.mxu0 0.0
        %1614 = vmatpush1.msra.mxu0 0.0
        %1615 = vmatprep.subr.mxu0 0.0
        %1616 = vmatpush1.msra.mxu0 0.0
        %1617 = vmatprep.subr.mxu0 0.0
        %1618 = vmatpush1.msra.mxu0 0.0
        %1619 = vmatprep.subr.mxu0 0.0
        %1620 = vmatpush1.msra.mxu0 0.0
        %1621 = vmatprep.subr.mxu0 0.0
        %1622 = vmatpush1.msra.mxu0 0.0
        %1623 = vmatprep.subr.mxu0 0.0
        %1624 = vmatpush1.msra.mxu0 0.0
        %1625 = vmatprep.subr.mxu0 0.0
        %1626 = vmatpush1.msra.mxu0 0.0
        %1627 = vmatprep.subr.mxu0 0.0
        %1628 = vmatpush1.msra.mxu0 0.0
        %1629 = vmatprep.subr.mxu0 0.0
        %1630 = vmatpush1.msra.mxu0 0.0
        %1631 = vmatprep.mubr.f32.mxu0 0.0
        %1632 = vmatmul.mubr.f32.gmra.mrb[0].mxu0 %v1512
        %v1633 = vpop.f32.mrb[0].mxu0
        %v1634 = vadd.f32 %v1565, %v1633
        %v1635 = vpop.f32.mrb[0].mxu0
        %1636 = vmatprep.mubr.f32.mxu0 0.0
        %1637 = vmatmul.mubr.f32.gmra.mrb[0].mxu0 %v1513
        %v1638 = vpop.f32.mrb[0].mxu0
        %v1639 = vadd.f32 %v1565, %v1638
        %v1640 = vpop.f32.mrb[0].mxu0
        %1641 = vmatprep.mubr.f32.mxu0 0.0
        %1642 = vmatmul.mubr.f32.gmra.mrb[0].mxu0 %v1514
        %v1643 = vpop.f32.mrb[0].mxu0
        %v1644 = vadd.f32 %v1565, %v1643
        %v1645 = vpop.f32.mrb[0].mxu0
        %1646 = vmatprep.mubr.f32.mxu0 0.0
        %1647 = vmatmul.mubr.f32.gmra.mrb[0].mxu0 %v1515
        %v1648 = vpop.f32.mrb[0].mxu0
        %v1649 = vadd.f32 %v1565, %v1648
        %v1650 = vpop.f32.mrb[0].mxu0
        %1651 = vmatprep.mubr.f32.mxu0 0.0
        %1652 = vmatmul.mubr.f32.gmra.mrb[0].mxu0 %v1516
        %v1653 = vpop.f32.mrb[0].mxu0
        %v1654 = vadd.f32 %v1565, %v1653
        %v1655 = vpop.f32.mrb[0].mxu0
        %1656 = vmatprep.mubr.f32.mxu0 0.0
        %1657 = vmatmul.mubr.f32.gmra.mrb[0].mxu0 %v1517
        %v1658 = vpop.f32.mrb[0].mxu0
        %v1659 = vadd.f32 %v1565, %v1658
        %v1660 = vpop.f32.mrb[0].mxu0
        %1661 = vmatprep.mubr.f32.mxu0 0.0
        %1662 = vmatmul.mubr.f32.gmra.mrb[0].mxu0 %v1518
        %v1663 = vpop.f32.mrb[0].mxu0
        %v1664 = vadd.f32 %v1565, %v1663
        %v1665 = vpop.f32.mrb[0].mxu0
        %1666 = vmatprep.mubr.f32.mxu0 0.0
        %1667 = vmatmul.mubr.f32.gmra.mrb[0].mxu0 %v1519
        %v1668 = vpop.f32.mrb[0].mxu0
        %v1669 = vadd.f32 %v1565, %v1668
        %v1670 = vpop.f32.mrb[0].mxu0
        %1671 = vmatprep.mubr.f32.mxu0 0.0
        %1672 = vmatmul.mubr.f32.gmra.mrb[0].mxu0 %v1520
        %v1673 = vpop.f32.mrb[0].mxu0
        %v1674 = vadd.f32 %v1565, %v1673
        %v1675 = vpop.f32.mrb[0].mxu0
        %1676 = vmatprep.mubr.f32.mxu0 0.0
        %1677 = vmatmul.mubr.f32.gmra.mrb[0].mxu0 %v1521
        %v1678 = vpop.f32.mrb[0].mxu0
        %v1679 = vadd.f32 %v1565, %v1678
        %v1680 = vpop.f32.mrb[0].mxu0
        %1681 = vmatprep.mubr.f32.mxu0 0.0
        %1682 = vmatmul.mubr.f32.gmra.mrb[0].mxu0 %v1522
        %v1683 = vpop.f32.mrb[0].mxu0
        %v1684 = vadd.f32 %v1565, %v1683
        %v1685 = vpop.f32.mrb[0].mxu0
        %1686 = vmatprep.mubr.f32.mxu0 0.0
        %1687 = vmatmul.mubr.f32.gmra.mrb[0].mxu0 %v1523
        %v1688 = vpop.f32.mrb[0].mxu0
        %v1689 = vadd.f32 %v1565, %v1688
        %v1690 = vpop.f32.mrb[0].mxu0
        %1691 = vmatprep.mubr.f32.mxu0 0.0
        %1692 = vmatmul.mubr.f32.gmra.mrb[0].mxu0 %v1524
        %v1693 = vpop.f32.mrb[0].mxu0
        %v1694 = vadd.f32 %v1565, %v1693
        %v1695 = vpop.f32.mrb[0].mxu0
        %1696 = vmatprep.mubr.f32.mxu0 0.0
        %1697 = vmatmul.mubr.f32.gmra.mrb[0].mxu0 %v1525
        %v1698 = vpop.f32.mrb[0].mxu0
        %v1699 = vadd.f32 %v1565, %v1698
        %v1700 = vpop.f32.mrb[0].mxu0
        %1701 = vmatprep.mubr.f32.mxu0 0.0
        %1702 = vmatmul.mubr.f32.gmra.mrb[0].mxu0 %v1526
        %v1703 = vpop.f32.mrb[0].mxu0
        %v1704 = vadd.f32 %v1565, %v1703
        %v1705 = vpop.f32.mrb[0].mxu0
        %1706 = vmatprep.mubr.f32.mxu0 0.0
        %1707 = vmatmul.mubr.f32.gmra.mrb[0].mxu0 %v1527
        %v1708 = vpop.f32.mrb[0].mxu0
        %v1709 = vadd.f32 %v1565, %v1708
        %v1710 = vpop.f32.mrb[0].mxu0
        %1711 = vmatprep.mubr.f32.mxu0 0.0
        %1712 = vmatmul.mubr.f32.gmra.mrb[0].mxu0 %v1528
        %v1713 = vpop.f32.mrb[0].mxu0
        %v1714 = vadd.f32 %v1565, %v1713
        %v1715 = vpop.f32.mrb[0].mxu0
        %1716 = vmatprep.mubr.f32.mxu0 0.0
        %1717 = vmatmul.mubr.f32.gmra.mrb[0].mxu0 %v1529
        %v1718 = vpop.f32.mrb[0].mxu0
        %v1719 = vadd.f32 %v1565, %v1718
        %v1720 = vpop.f32.mrb[0].mxu0
        %1721 = vmatprep.mubr.f32.mxu0 0.0
        %1722 = vmatmul.mubr.f32.gmra.mrb[0].mxu0 %v1530
        %v1723 = vpop.f32.mrb[0].mxu0
        %v1724 = vadd.f32 %v1565, %v1723
        %v1725 = vpop.f32.mrb[0].mxu0
        %1726 = vmatprep.mubr.f32.mxu0 0.0
        %1727 = vmatmul.mubr.f32.gmra.mrb[0].mxu0 %v1531
        %v1728 = vpop.f32.mrb[0].mxu0
        %v1729 = vadd.f32 %v1565, %v1728
        %v1730 = vpop.f32.mrb[0].mxu0
        %1731 = vmatprep.mubr.f32.mxu0 0.0
        %1732 = vmatmul.mubr.f32.gmra.mrb[0].mxu0 %v1532
        %v1733 = vpop.f32.mrb[0].mxu0
        %v1734 = vadd.f32 %v1565, %v1733
        %v1735 = vpop.f32.mrb[0].mxu0
        %1736 = vmatprep.mubr.f32.mxu0 0.0
        %1737 = vmatmul.mubr.f32.gmra.mrb[0].mxu0 %v1533
        %v1738 = vpop.f32.mrb[0].mxu0
        %v1739 = vadd.f32 %v1565, %v1738
        %v1740 = vpop.f32.mrb[0].mxu0
        %1741 = vmatprep.mubr.f32.mxu0 0.0
        %1742 = vmatmul.mubr.f32.gmra.mrb[0].mxu0 %v1534
        %v1743 = vpop.f32.mrb[0].mxu0
        %v1744 = vadd.f32 %v1565, %v1743
        %v1745 = vpop.f32.mrb[0].mxu0
        %1746 = vmatprep.mubr.f32.mxu0 0.0
        %1747 = vmatmul.mubr.f32.gmra.mrb[0].mxu0 %v1535
        %v1748 = vpop.f32.mrb[0].mxu0
        %v1749 = vadd.f32 %v1565, %v1748
        %v1750 = vpop.f32.mrb[0].mxu0
        %1751 = vmatprep.mubr.f32.mxu0 0.0
        %1752 = vmatmul.mubr.f32.gmra.mrb[0].mxu0 %v1536
        %v1753 = vpop.f32.mrb[0].mxu0
        %v1754 = vadd.f32 %v1565, %v1753
        %v1755 = vpop.f32.mrb[0].mxu0
        %1756 = vmatprep.mubr.f32.mxu0 0.0
        %1757 = vmatmul.mubr.f32.gmra.mrb[0].mxu0 %v1537
        %v1758 = vpop.f32.mrb[0].mxu0
        %v1759 = vadd.f32 %v1565, %v1758
        %v1760 = vpop.f32.mrb[0].mxu0
        %1761 = vmatprep.mubr.f32.mxu0 0.0
        %1762 = vmatmul.mubr.f32.gmra.mrb[0].mxu0 %v1538
        %v1763 = vpop.f32.mrb[0].mxu0
        %v1764 = vadd.f32 %v1565, %v1763
        %v1765 = vpop.f32.mrb[0].mxu0
        %1766 = vmatprep.mubr.f32.mxu0 0.0
        %1767 = vmatmul.mubr.f32.gmra.mrb[0].mxu0 %v1539
        %v1768 = vpop.f32.mrb[0].mxu0
        %v1769 = vadd.f32 %v1565, %v1768
        %v1770 = vpop.f32.mrb[0].mxu0
        %1771 = vmatprep.mubr.f32.mxu0 0.0
        %1772 = vmatmul.mubr.f32.gmra.mrb[0].mxu0 %v1540
        %v1773 = vpop.f32.mrb[0].mxu0
        %v1774 = vadd.f32 %v1565, %v1773
        %v1775 = vpop.f32.mrb[0].mxu0
        %1776 = vmatprep.mubr.f32.mxu0 0.0
        %1777 = vmatmul.mubr.f32.gmra.mrb[0].mxu0 %v1541
        %v1778 = vpop.f32.mrb[0].mxu0
        %v1779 = vadd.f32 %v1565, %v1778
        %v1780 = vpop.f32.mrb[0].mxu0
        %1781 = vmatprep.mubr.f32.mxu0 0.0
        %1782 = vmatmul.mubr.f32.gmra.mrb[0].mxu0 %v1542
        %v1783 = vpop.f32.mrb[0].mxu0
        %v1784 = vadd.f32 %v1565, %v1783
        %v1785 = vpop.f32.mrb[0].mxu0
        %1786 = vmatprep.mubr.f32.mxu0 0.0
        %1787 = vmatmul.mubr.f32.gmra.mrb[0].mxu0 %v1543
        %v1788 = vpop.f32.mrb[0].mxu0
        %v1789 = vadd.f32 %v1565, %v1788
        %v1790 = vpop.f32.mrb[0].mxu0
        %1791 = vdwg.mxu0
        %vm1792 = vcmp.gt.f32.partialorder %v1634, 0.0
        %vm1793 = vcmp.gt.f32.partialorder %v1639, 0.0
        %vm1794 = vcmp.gt.f32.partialorder %v1644, 0.0
        %vm1795 = vcmp.gt.f32.partialorder %v1649, 0.0
        %vm1796 = vcmp.gt.f32.partialorder %v1654, 0.0
        %vm1797 = vcmp.gt.f32.partialorder %v1659, 0.0
        %vm1798 = vcmp.gt.f32.partialorder %v1664, 0.0
        %vm1799 = vcmp.gt.f32.partialorder %v1669, 0.0
        %vm1800 = vcmp.gt.f32.partialorder %v1674, 0.0
        %vm1801 = vcmp.gt.f32.partialorder %v1679, 0.0
        %vm1802 = vcmp.gt.f32.partialorder %v1684, 0.0
        %vm1803 = vcmp.gt.f32.partialorder %v1689, 0.0
        %vm1804 = vcmp.gt.f32.partialorder %v1694, 0.0
        %vm1805 = vcmp.gt.f32.partialorder %v1699, 0.0
        %vm1806 = vcmp.gt.f32.partialorder %v1704, 0.0
        %vm1807 = vcmp.gt.f32.partialorder %v1709, 0.0
        %vm1808 = vcmp.gt.f32.partialorder %v1714, 0.0
        %vm1809 = vcmp.gt.f32.partialorder %v1719, 0.0
        %vm1810 = vcmp.gt.f32.partialorder %v1724, 0.0
        %vm1811 = vcmp.gt.f32.partialorder %v1729, 0.0
        %vm1812 = vcmp.gt.f32.partialorder %v1734, 0.0
        %vm1813 = vcmp.gt.f32.partialorder %v1739, 0.0
        %vm1814 = vcmp.gt.f32.partialorder %v1744, 0.0
        %vm1815 = vcmp.gt.f32.partialorder %v1749, 0.0
        %vm1816 = vcmp.gt.f32.partialorder %v1754, 0.0
        %vm1817 = vcmp.gt.f32.partialorder %v1759, 0.0
        %vm1818 = vcmp.gt.f32.partialorder %v1764, 0.0
        %vm1819 = vcmp.gt.f32.partialorder %v1769, 0.0
        %vm1820 = vcmp.gt.f32.partialorder %v1774, 0.0
        %vm1821 = vcmp.gt.f32.partialorder %v1779, 0.0
        %vm1822 = vcmp.gt.f32.partialorder %v1784, 0.0
        %vm1823 = vcmp.gt.f32.partialorder %v1789, 0.0
        %v1824 = vmul.f32 %v1634, 0.01
        %v1825 = vmul.f32 %v1639, 0.01
        %v1826 = vmul.f32 %v1644, 0.01
        %v1827 = vmul.f32 %v1649, 0.01
        %v1828 = vmul.f32 %v1654, 0.01
        %v1829 = vmul.f32 %v1659, 0.01
        %v1830 = vmul.f32 %v1664, 0.01
        %v1831 = vmul.f32 %v1669, 0.01
        %v1832 = vmul.f32 %v1674, 0.01
        %v1833 = vmul.f32 %v1679, 0.01
        %v1834 = vmul.f32 %v1684, 0.01
        %v1835 = vmul.f32 %v1689, 0.01
        %v1836 = vmul.f32 %v1694, 0.01
        %v1837 = vmul.f32 %v1699, 0.01
        %v1838 = vmul.f32 %v1704, 0.01
        %v1839 = vmul.f32 %v1709, 0.01
        %v1840 = vmul.f32 %v1714, 0.01
        %v1841 = vmul.f32 %v1719, 0.01
        %v1842 = vmul.f32 %v1724, 0.01
        %v1843 = vmul.f32 %v1729, 0.01
        %v1844 = vmul.f32 %v1734, 0.01
        %v1845 = vmul.f32 %v1739, 0.01
        %v1846 = vmul.f32 %v1744, 0.01
        %v1847 = vmul.f32 %v1749, 0.01
        %v1848 = vmul.f32 %v1754, 0.01
        %v1849 = vmul.f32 %v1759, 0.01
        %v1850 = vmul.f32 %v1764, 0.01
        %v1851 = vmul.f32 %v1769, 0.01
        %v1852 = vmul.f32 %v1774, 0.01
        %v1853 = vmul.f32 %v1779, 0.01
        %v1854 = vmul.f32 %v1784, 0.01
        %v1855 = vmul.f32 %v1789, 0.01
        %v1856 = vsel %vm1792, %v1634, %v1824
        %v1857 = vsel %vm1793, %v1639, %v1825
        %v1858 = vsel %vm1794, %v1644, %v1826
        %v1859 = vsel %vm1795, %v1649, %v1827
        %v1860 = vsel %vm1796, %v1654, %v1828
        %v1861 = vsel %vm1797, %v1659, %v1829
        %v1862 = vsel %vm1798, %v1664, %v1830
        %v1863 = vsel %vm1799, %v1669, %v1831
        %v1864 = vsel %vm1800, %v1674, %v1832
        %v1865 = vsel %vm1801, %v1679, %v1833
        %v1866 = vsel %vm1802, %v1684, %v1834
        %v1867 = vsel %vm1803, %v1689, %v1835
        %v1868 = vsel %vm1804, %v1694, %v1836
        %v1869 = vsel %vm1805, %v1699, %v1837
        %v1870 = vsel %vm1806, %v1704, %v1838
        %v1871 = vsel %vm1807, %v1709, %v1839
        %v1872 = vsel %vm1808, %v1714, %v1840
        %v1873 = vsel %vm1809, %v1719, %v1841
        %v1874 = vsel %vm1810, %v1724, %v1842
        %v1875 = vsel %vm1811, %v1729, %v1843
        %v1876 = vsel %vm1812, %v1734, %v1844
        %v1877 = vsel %vm1813, %v1739, %v1845
        %v1878 = vsel %vm1814, %v1744, %v1846
        %v1879 = vsel %vm1815, %v1749, %v1847
        %v1880 = vsel %vm1816, %v1754, %v1848
        %v1881 = vsel %vm1817, %v1759, %v1849
        %v1882 = vsel %vm1818, %v1764, %v1850
        %v1883 = vsel %vm1819, %v1769, %v1851
        %v1884 = vsel %vm1820, %v1774, %v1852
        %v1885 = vsel %vm1821, %v1779, %v1853
        %v1886 = vsel %vm1822, %v1784, %v1854
        %v1887 = vsel %vm1823, %v1789, %v1855
        %v1888 = vld [vmem:[#allocation11] sm:$0xff]
        %v1889 = vld [vmem:[#allocation11 + $0x8] sm:$0xff]
        %v1890 = vld [vmem:[#allocation11 + $0x10] sm:$0xff]
        %v1891 = vld [vmem:[#allocation11 + $0x18] sm:$0xff]
        %v1892 = vld [vmem:[#allocation11 + $0x20] sm:$0xff]
        %v1893 = vld [vmem:[#allocation11 + $0x28] sm:$0xff]
        %v1894 = vld [vmem:[#allocation11 + $0x30] sm:$0xff]
        %v1895 = vld [vmem:[#allocation11 + $0x38] sm:$0xff]
        %v1896 = vld [vmem:[#allocation11 + $0x40] sm:$0xff]
        %v1897 = vld [vmem:[#allocation11 + $0x48] sm:$0xff]
        %v1898 = vld [vmem:[#allocation11 + $0x50] sm:$0xff]
        %v1899 = vld [vmem:[#allocation11 + $0x58] sm:$0xff]
        %v1900 = vld [vmem:[#allocation11 + $0x60] sm:$0xff]
        %v1901 = vld [vmem:[#allocation11 + $0x68] sm:$0xff]
        %v1902 = vld [vmem:[#allocation11 + $0x70] sm:$0xff]
        %v1903 = vld [vmem:[#allocation11 + $0x78] sm:$0xff]
        %v1904 = vld [vmem:[%s10] sm:$0x1]
        %v1906 = vlaneseq
        %v1907 = vshrl.u32 %v1906, 7
        %v1908 = vsub.s32 0, %v1907
        %v1909 = vrot.slane %v1904, %v1908
        %1911 = vmatprep.subr.mxu0 0.0
        %1912 = vmatpush1.msra.mxu0 %v1888
        %1913 = vmatprep.subr.mxu0 0.0
        %1914 = vmatpush1.msra.mxu0 %v1889
        %1915 = vmatprep.subr.mxu0 0.0
        %1916 = vmatpush1.msra.mxu0 %v1890
        %1917 = vmatprep.subr.mxu0 0.0
        %1918 = vmatpush1.msra.mxu0 %v1891
        %1919 = vmatprep.subr.mxu0 0.0
        %1920 = vmatpush1.msra.mxu0 %v1892
        %1921 = vmatprep.subr.mxu0 0.0
        %1922 = vmatpush1.msra.mxu0 %v1893
        %1923 = vmatprep.subr.mxu0 0.0
        %1924 = vmatpush1.msra.mxu0 %v1894
        %1925 = vmatprep.subr.mxu0 0.0
        %1926 = vmatpush1.msra.mxu0 %v1895
        %1927 = vmatprep.subr.mxu0 0.0
        %1928 = vmatpush1.msra.mxu0 %v1896
        %1929 = vmatprep.subr.mxu0 0.0
        %1930 = vmatpush1.msra.mxu0 %v1897
        %1931 = vmatprep.subr.mxu0 0.0
        %1932 = vmatpush1.msra.mxu0 %v1898
        %1933 = vmatprep.subr.mxu0 0.0
        %1934 = vmatpush1.msra.mxu0 %v1899
        %1935 = vmatprep.subr.mxu0 0.0
        %1936 = vmatpush1.msra.mxu0 %v1900
        %1937 = vmatprep.subr.mxu0 0.0
        %1938 = vmatpush1.msra.mxu0 %v1901
        %1939 = vmatprep.subr.mxu0 0.0
        %1940 = vmatpush1.msra.mxu0 %v1902
        %1941 = vmatprep.subr.mxu0 0.0
        %1942 = vmatpush1.msra.mxu0 %v1903
        %1943 = vmatprep.subr.mxu0 0.0
        %1944 = vmatpush1.msra.mxu0 0.0
        %1945 = vmatprep.subr.mxu0 0.0
        %1946 = vmatpush1.msra.mxu0 0.0
        %1947 = vmatprep.subr.mxu0 0.0
        %1948 = vmatpush1.msra.mxu0 0.0
        %1949 = vmatprep.subr.mxu0 0.0
        %1950 = vmatpush1.msra.mxu0 0.0
        %1951 = vmatprep.subr.mxu0 0.0
        %1952 = vmatpush1.msra.mxu0 0.0
        %1953 = vmatprep.subr.mxu0 0.0
        %1954 = vmatpush1.msra.mxu0 0.0
        %1955 = vmatprep.subr.mxu0 0.0
        %1956 = vmatpush1.msra.mxu0 0.0
        %1957 = vmatprep.subr.mxu0 0.0
        %1958 = vmatpush1.msra.mxu0 0.0
        %1959 = vmatprep.subr.mxu0 0.0
        %1960 = vmatpush1.msra.mxu0 0.0
        %1961 = vmatprep.subr.mxu0 0.0
        %1962 = vmatpush1.msra.mxu0 0.0
        %1963 = vmatprep.subr.mxu0 0.0
        %1964 = vmatpush1.msra.mxu0 0.0
        %1965 = vmatprep.subr.mxu0 0.0
        %1966 = vmatpush1.msra.mxu0 0.0
        %1967 = vmatprep.subr.mxu0 0.0
        %1968 = vmatpush1.msra.mxu0 0.0
        %1969 = vmatprep.subr.mxu0 0.0
        %1970 = vmatpush1.msra.mxu0 0.0
        %1971 = vmatprep.subr.mxu0 0.0
        %1972 = vmatpush1.msra.mxu0 0.0
        %1973 = vmatprep.subr.mxu0 0.0
        %1974 = vmatpush1.msra.mxu0 0.0
        %1975 = vmatprep.mubr.f32.mxu0 0.0
        %1976 = vmatmul.mubr.f32.gmra.mrb[0].mxu0 %v1856
        %v1977 = vpop.f32.mrb[0].mxu0
        %v1978 = vadd.f32 %v1909, %v1977
        %v1979 = vpop.f32.mrb[0].mxu0
        %1980 = vmatprep.mubr.f32.mxu0 0.0
        %1981 = vmatmul.mubr.f32.gmra.mrb[0].mxu0 %v1857
        %v1982 = vpop.f32.mrb[0].mxu0
        %v1983 = vadd.f32 %v1909, %v1982
        %v1984 = vpop.f32.mrb[0].mxu0
        %1985 = vmatprep.mubr.f32.mxu0 0.0
        %1986 = vmatmul.mubr.f32.gmra.mrb[0].mxu0 %v1858
        %v1987 = vpop.f32.mrb[0].mxu0
        %v1988 = vadd.f32 %v1909, %v1987
        %v1989 = vpop.f32.mrb[0].mxu0
        %1990 = vmatprep.mubr.f32.mxu0 0.0
        %1991 = vmatmul.mubr.f32.gmra.mrb[0].mxu0 %v1859
        %v1992 = vpop.f32.mrb[0].mxu0
        %v1993 = vadd.f32 %v1909, %v1992
        %v1994 = vpop.f32.mrb[0].mxu0
        %1995 = vmatprep.mubr.f32.mxu0 0.0
        %1996 = vmatmul.mubr.f32.gmra.mrb[0].mxu0 %v1860
        %v1997 = vpop.f32.mrb[0].mxu0
        %v1998 = vadd.f32 %v1909, %v1997
        %v1999 = vpop.f32.mrb[0].mxu0
        %2000 = vmatprep.mubr.f32.mxu0 0.0
        %2001 = vmatmul.mubr.f32.gmra.mrb[0].mxu0 %v1861
        %v2002 = vpop.f32.mrb[0].mxu0
        %v2003 = vadd.f32 %v1909, %v2002
        %v2004 = vpop.f32.mrb[0].mxu0
        %2005 = vmatprep.mubr.f32.mxu0 0.0
        %2006 = vmatmul.mubr.f32.gmra.mrb[0].mxu0 %v1862
        %v2007 = vpop.f32.mrb[0].mxu0
        %v2008 = vadd.f32 %v1909, %v2007
        %v2009 = vpop.f32.mrb[0].mxu0
        %2010 = vmatprep.mubr.f32.mxu0 0.0
        %2011 = vmatmul.mubr.f32.gmra.mrb[0].mxu0 %v1863
        %v2012 = vpop.f32.mrb[0].mxu0
        %v2013 = vadd.f32 %v1909, %v2012
        %v2014 = vpop.f32.mrb[0].mxu0
        %2015 = vmatprep.mubr.f32.mxu0 0.0
        %2016 = vmatmul.mubr.f32.gmra.mrb[0].mxu0 %v1864
        %v2017 = vpop.f32.mrb[0].mxu0
        %v2018 = vadd.f32 %v1909, %v2017
        %v2019 = vpop.f32.mrb[0].mxu0
        %2020 = vmatprep.mubr.f32.mxu0 0.0
        %2021 = vmatmul.mubr.f32.gmra.mrb[0].mxu0 %v1865
        %v2022 = vpop.f32.mrb[0].mxu0
        %v2023 = vadd.f32 %v1909, %v2022
        %v2024 = vpop.f32.mrb[0].mxu0
        %2025 = vmatprep.mubr.f32.mxu0 0.0
        %2026 = vmatmul.mubr.f32.gmra.mrb[0].mxu0 %v1866
        %v2027 = vpop.f32.mrb[0].mxu0
        %v2028 = vadd.f32 %v1909, %v2027
        %v2029 = vpop.f32.mrb[0].mxu0
        %2030 = vmatprep.mubr.f32.mxu0 0.0
        %2031 = vmatmul.mubr.f32.gmra.mrb[0].mxu0 %v1867
        %v2032 = vpop.f32.mrb[0].mxu0
        %v2033 = vadd.f32 %v1909, %v2032
        %v2034 = vpop.f32.mrb[0].mxu0
        %2035 = vmatprep.mubr.f32.mxu0 0.0
        %2036 = vmatmul.mubr.f32.gmra.mrb[0].mxu0 %v1868
        %v2037 = vpop.f32.mrb[0].mxu0
        %v2038 = vadd.f32 %v1909, %v2037
        %v2039 = vpop.f32.mrb[0].mxu0
        %2040 = vmatprep.mubr.f32.mxu0 0.0
        %2041 = vmatmul.mubr.f32.gmra.mrb[0].mxu0 %v1869
        %v2042 = vpop.f32.mrb[0].mxu0
        %v2043 = vadd.f32 %v1909, %v2042
        %v2044 = vpop.f32.mrb[0].mxu0
        %2045 = vmatprep.mubr.f32.mxu0 0.0
        %2046 = vmatmul.mubr.f32.gmra.mrb[0].mxu0 %v1870
        %v2047 = vpop.f32.mrb[0].mxu0
        %v2048 = vadd.f32 %v1909, %v2047
        %v2049 = vpop.f32.mrb[0].mxu0
        %2050 = vmatprep.mubr.f32.mxu0 0.0
        %2051 = vmatmul.mubr.f32.gmra.mrb[0].mxu0 %v1871
        %v2052 = vpop.f32.mrb[0].mxu0
        %v2053 = vadd.f32 %v1909, %v2052
        %v2054 = vpop.f32.mrb[0].mxu0
        %2055 = vmatprep.mubr.f32.mxu0 0.0
        %2056 = vmatmul.mubr.f32.gmra.mrb[0].mxu0 %v1872
        %v2057 = vpop.f32.mrb[0].mxu0
        %v2058 = vadd.f32 %v1909, %v2057
        %v2059 = vpop.f32.mrb[0].mxu0
        %2060 = vmatprep.mubr.f32.mxu0 0.0
        %2061 = vmatmul.mubr.f32.gmra.mrb[0].mxu0 %v1873
        %v2062 = vpop.f32.mrb[0].mxu0
        %v2063 = vadd.f32 %v1909, %v2062
        %v2064 = vpop.f32.mrb[0].mxu0
        %2065 = vmatprep.mubr.f32.mxu0 0.0
        %2066 = vmatmul.mubr.f32.gmra.mrb[0].mxu0 %v1874
        %v2067 = vpop.f32.mrb[0].mxu0
        %v2068 = vadd.f32 %v1909, %v2067
        %v2069 = vpop.f32.mrb[0].mxu0
        %2070 = vmatprep.mubr.f32.mxu0 0.0
        %2071 = vmatmul.mubr.f32.gmra.mrb[0].mxu0 %v1875
        %v2072 = vpop.f32.mrb[0].mxu0
        %v2073 = vadd.f32 %v1909, %v2072
        %v2074 = vpop.f32.mrb[0].mxu0
        %2075 = vmatprep.mubr.f32.mxu0 0.0
        %2076 = vmatmul.mubr.f32.gmra.mrb[0].mxu0 %v1876
        %v2077 = vpop.f32.mrb[0].mxu0
        %v2078 = vadd.f32 %v1909, %v2077
        %v2079 = vpop.f32.mrb[0].mxu0
        %2080 = vmatprep.mubr.f32.mxu0 0.0
        %2081 = vmatmul.mubr.f32.gmra.mrb[0].mxu0 %v1877
        %v2082 = vpop.f32.mrb[0].mxu0
        %v2083 = vadd.f32 %v1909, %v2082
        %v2084 = vpop.f32.mrb[0].mxu0
        %2085 = vmatprep.mubr.f32.mxu0 0.0
        %2086 = vmatmul.mubr.f32.gmra.mrb[0].mxu0 %v1878
        %v2087 = vpop.f32.mrb[0].mxu0
        %v2088 = vadd.f32 %v1909, %v2087
        %v2089 = vpop.f32.mrb[0].mxu0
        %2090 = vmatprep.mubr.f32.mxu0 0.0
        %2091 = vmatmul.mubr.f32.gmra.mrb[0].mxu0 %v1879
        %v2092 = vpop.f32.mrb[0].mxu0
        %v2093 = vadd.f32 %v1909, %v2092
        %v2094 = vpop.f32.mrb[0].mxu0
        %2095 = vmatprep.mubr.f32.mxu0 0.0
        %2096 = vmatmul.mubr.f32.gmra.mrb[0].mxu0 %v1880
        %v2097 = vpop.f32.mrb[0].mxu0
        %v2098 = vadd.f32 %v1909, %v2097
        %v2099 = vpop.f32.mrb[0].mxu0
        %2100 = vmatprep.mubr.f32.mxu0 0.0
        %2101 = vmatmul.mubr.f32.gmra.mrb[0].mxu0 %v1881
        %v2102 = vpop.f32.mrb[0].mxu0
        %v2103 = vadd.f32 %v1909, %v2102
        %v2104 = vpop.f32.mrb[0].mxu0
        %2105 = vmatprep.mubr.f32.mxu0 0.0
        %2106 = vmatmul.mubr.f32.gmra.mrb[0].mxu0 %v1882
        %v2107 = vpop.f32.mrb[0].mxu0
        %v2108 = vadd.f32 %v1909, %v2107
        %v2109 = vpop.f32.mrb[0].mxu0
        %2110 = vmatprep.mubr.f32.mxu0 0.0
        %2111 = vmatmul.mubr.f32.gmra.mrb[0].mxu0 %v1883
        %v2112 = vpop.f32.mrb[0].mxu0
        %v2113 = vadd.f32 %v1909, %v2112
        %v2114 = vpop.f32.mrb[0].mxu0
        %2115 = vmatprep.mubr.f32.mxu0 0.0
        %2116 = vmatmul.mubr.f32.gmra.mrb[0].mxu0 %v1884
        %v2117 = vpop.f32.mrb[0].mxu0
        %v2118 = vadd.f32 %v1909, %v2117
        %v2119 = vpop.f32.mrb[0].mxu0
        %2120 = vmatprep.mubr.f32.mxu0 0.0
        %2121 = vmatmul.mubr.f32.gmra.mrb[0].mxu0 %v1885
        %v2122 = vpop.f32.mrb[0].mxu0
        %v2123 = vadd.f32 %v1909, %v2122
        %v2124 = vpop.f32.mrb[0].mxu0
        %2125 = vmatprep.mubr.f32.mxu0 0.0
        %2126 = vmatmul.mubr.f32.gmra.mrb[0].mxu0 %v1886
        %v2127 = vpop.f32.mrb[0].mxu0
        %v2128 = vadd.f32 %v1909, %v2127
        %v2129 = vpop.f32.mrb[0].mxu0
        %2130 = vmatprep.mubr.f32.mxu0 0.0
        %2131 = vmatmul.mubr.f32.gmra.mrb[0].mxu0 %v1887
        %v2132 = vpop.f32.mrb[0].mxu0
        %v2133 = vadd.f32 %v1909, %v2132
        %v2134 = vpop.f32.mrb[0].mxu0
        %2135 = vdwg.mxu0
        %2136 = vst [vmem:[%s477] sm:$0xff] %v1978
        %2137 = vst [vmem:[%s477 + $0x8] sm:$0xff] %v1983
        %2138 = vst [vmem:[%s477 + $0x10] sm:$0xff] %v1988
        %2139 = vst [vmem:[%s477 + $0x18] sm:$0xff] %v1993
        %2140 = vst [vmem:[%s477 + $0x20] sm:$0xff] %v1998
        %2141 = vst [vmem:[%s477 + $0x28] sm:$0xff] %v2003
        %2142 = vst [vmem:[%s477 + $0x30] sm:$0xff] %v2008
        %2143 = vst [vmem:[%s477 + $0x38] sm:$0xff] %v2013
        %2144 = vst [vmem:[%s477 + $0x40] sm:$0xff] %v2018
        %2145 = vst [vmem:[%s477 + $0x48] sm:$0xff] %v2023
        %2146 = vst [vmem:[%s477 + $0x50] sm:$0xff] %v2028
        %2147 = vst [vmem:[%s477 + $0x58] sm:$0xff] %v2033
        %2148 = vst [vmem:[%s477 + $0x60] sm:$0xff] %v2038
        %2149 = vst [vmem:[%s477 + $0x68] sm:$0xff] %v2043
        %2150 = vst [vmem:[%s477 + $0x70] sm:$0xff] %v2048
        %2151 = vst [vmem:[%s477 + $0x78] sm:$0xff] %v2053
        %2152 = vst [vmem:[%s477 + $0x80] sm:$0xff] %v2058
        %2153 = vst [vmem:[%s477 + $0x88] sm:$0xff] %v2063
        %2154 = vst [vmem:[%s477 + $0x90] sm:$0xff] %v2068
        %2155 = vst [vmem:[%s477 + $0x98] sm:$0xff] %v2073
        %2156 = vst [vmem:[%s477 + $0xa0] sm:$0xff] %v2078
        %2157 = vst [vmem:[%s477 + $0xa8] sm:$0xff] %v2083
        %2158 = vst [vmem:[%s477 + $0xb0] sm:$0xff] %v2088
        %2159 = vst [vmem:[%s477 + $0xb8] sm:$0xff] %v2093
        %2160 = vst [vmem:[%s477 + $0xc0] sm:$0xff] %v2098
        %2161 = vst [vmem:[%s477 + $0xc8] sm:$0xff] %v2103
        %2162 = vst [vmem:[%s477 + $0xd0] sm:$0xff] %v2108
        %2163 = vst [vmem:[%s477 + $0xd8] sm:$0xff] %v2113
        %2164 = vst [vmem:[%s477 + $0xe0] sm:$0xff] %v2118
        %2165 = vst [vmem:[%s477 + $0xe8] sm:$0xff] %v2123
        %2166 = vst [vmem:[%s477 + $0xf0] sm:$0xff] %v2128
        %2167 = vst [vmem:[%s477 + $0xf8] sm:$0xff] %v2133
        %s2168 = sand.u32 %s275, 1
        %s2169 = scalar_lea.sflag [#allocation4], %s2168
        %s2170 = sand.u32 %s275, 1
        %s2171 = smul.addr %s2170, 256
        %s2172 = scalar_lea.vmem [#allocation13], %s2171
        // Predicated region
        $region89: #{tpu_custom_call.1} parent=63 // pred_check
          %p2173 = pneg %p285
        $region90: #{tpu_custom_call.1} parent=63 // pred_check_branch
          %2175 = sbr.rel (%p2173) target = $region92
        $region91: #{tpu_custom_call.1} parent=63 // pred_region
          %s2176 = smul.u32 32, %s31
          %s2178 = ssub.s32 4096, 4096
          %2179 = vsyncadd %s2169, %s2178
          %s2180 = smul.addr %s2176, 128
          %s2181 = scalar_lea.hbm %s11, %s2180
          %s2182 = sshll.u32 %s2172, 4
          %s2183 = int_to_ptr.vmem [resolvable:$true] %s2182
          %2188 = dma.vmem_to_hbm [thread:$0]  %s2183, 4096, %s2181, %s2169, 128, 128, 8
        $region92: #{tpu_custom_call.1} parent=63 // pred_fallthru
          _
      $region64: #{tpu_custom_call.1} parent=5 // pred_fallthru
        _
      %p2189 = scmp.le.s32.totalorder 2, %s26
      // Predicated region
      $region93: #{tpu_custom_call.1} parent=5 // pred_check
        %p2190 = pneg %p2189
      $region94: #{tpu_custom_call.1} parent=5 // pred_check_branch
        %2192 = sbr.rel (%p2190) target = $region96
      $region95: #{tpu_custom_call.1} parent=5 // pred_region
        %s2193 = ssub.s32 %s26, 2
        // Predicated region
        $region97: #{tpu_custom_call.1} parent=95 // pred_check
          %p2194 = pneg %p291
        $region98: #{tpu_custom_call.1} parent=95 // pred_check_branch
          %2196 = sbr.rel (%p2194) target = $region100
        $region99: #{tpu_custom_call.1} parent=95 // pred_region
          %s2197 = sand.u32 %s276, 1
          %s2198 = scalar_lea.sflag [#allocation4], %s2197
          %s2199 = sand.u32 %s276, 1
          %s2200 = smul.addr %s2199, 256
          %s2201 = scalar_lea.vmem [#allocation13], %s2200
          %2202 = dma.done %s2198, 4096
        $region100: #{tpu_custom_call.1} parent=95 // pred_fallthru
          _
      $region96: #{tpu_custom_call.1} parent=5 // pred_fallthru
        _
    $region6: #{tpu_custom_call.1} parent=1 // loop_footer
      %s30 = sadd.s32 1, %s26
    $region7: #{tpu_custom_call.1} parent=1 // loop_footer_branch
      %25 = sbr.rel target = $region3
    $region8: #{tpu_custom_call.1} parent=1 // loop_exit
      _
    %2203 = vsyncpa [#allocation3], 1
    %s2204 = scalar_lea.sflag [#allocation3], 1
    %2205 = vsyncpa %s2204, 1
    %2206 = vsyncpa [#allocation6], 1
    %2207 = vsyncpa [#allocation9], 1
    %2208 = vsyncpa [#allocation12], 1
    %2209 = vsyncpa [#allocation4], 1
    %s2210 = scalar_lea.sflag [#allocation4], 1
    %2211 = vsyncpa %s2210, 1

</llo_original>
